<compile_context>
chip_gen: v5e
topology: v5e:2x2
jax: 0.10.0
libtpu: 0.0.40
codegen_flags: <defaults>
</compile_context>

<pallas_src>
import math
from functools import partial

import jax
import jax.numpy as jnp
from jax.experimental import pallas as pl
from jax.experimental.pallas import tpu as pltpu


# ----------------------------------------------------------------------------
# Fused kernel: K/V projection (once per batch) + Q projection + per-head
# scaled dot-product attention + concat + output projection.
# ----------------------------------------------------------------------------
def mha_kernel(q_ref, k_ref, v_ref,
               wq_ref, bq_ref, wk_ref, bk_ref, wv_ref, bv_ref, wo_ref, bo_ref,
               o_ref, w_ref,
               kp_ref, vp_ref, qp_ref, cat_ref,
               *, num_heads, depth, scale):
    # ---- K / V projections: computed once per batch element (qi == 0) and
    # kept resident in VMEM scratch across all Lq tiles of this batch. -------
    @pl.when(pl.program_id(1) == 0)
    def _():
        k_bf = k_ref[0].astype(jnp.bfloat16)          # (Lk, Ck)
        v_bf = v_ref[0].astype(jnp.bfloat16)          # (Lk, Ck)
        kp_ref[...] = (
            jnp.dot(k_bf, wk_ref[...], preferred_element_type=jnp.float32)
            + bk_ref[...]
        ).astype(kp_ref.dtype)
        vp_ref[...] = (
            jnp.dot(v_bf, wv_ref[...], preferred_element_type=jnp.float32)
            + bv_ref[...]
        ).astype(vp_ref.dtype)

    # ---- Q projection; softmax scale 1/sqrt(d) folded into Q (O(Lq*D)
    # instead of O(H*Lq*Lk)). -------------------------------------------------
    q_bf = q_ref[0].astype(jnp.bfloat16)              # (tq, Cq)
    qp_ref[...] = (
        jnp.dot(q_bf, wq_ref[...], preferred_element_type=jnp.float32)
        + bq_ref[...]
    ) * scale

    # ---- Per-head attention (unrolled; head split = column window of D). ---
    for h in range(num_heads):
        lo = h * depth
        qh = qp_ref[:, lo:lo + depth].astype(jnp.bfloat16)   # (tq, d)
        kh = kp_ref[:, lo:lo + depth].astype(jnp.bfloat16)   # (Lk, d)
        vh = vp_ref[:, lo:lo + depth].astype(jnp.bfloat16)   # (Lk, d)

        # q @ k^T without materializing a transpose (contract the d axes).
        scores = jax.lax.dot_general(
            qh, kh, (((1,), (1,)), ((), ())),
            preferred_element_type=jnp.float32)              # (tq, Lk) f32
        scores = scores - jnp.max(scores, axis=-1, keepdims=True)
        e = jnp.exp(scores)
        s = jnp.sum(e, axis=-1, keepdims=True)
        wgt = e / s            # exact divide: attention_weights is a public output

        w_ref[0, h] = wgt.astype(w_ref.dtype)
        # Write head output straight into concat layout (columns h*d:(h+1)*d).
        cat_ref[:, lo:lo + depth] = jnp.dot(
            wgt.astype(jnp.bfloat16), vh,
            preferred_element_type=jnp.float32)

    # ---- Final linear projection fused in. ----------------------------------
    o_ref[0] = (
        jnp.dot(cat_ref[...].astype(jnp.bfloat16), wo_ref[...],
                preferred_element_type=jnp.float32)
        + bo_ref[...]
    ).astype(o_ref.dtype)


def fused_mha(q_raw, k_raw, v_raw, wq, bq, wk, bk, wv, bv, wo, bo,
              *, num_heads, depth, tq_max=128):
    """q_raw: (B, Lq, Cq); k_raw/v_raw: (B, Lk, Ck).

    Weights wq/wk/wv/wo are bf16 (in_features, out_features); biases are f32.
    Returns (outputs (B, Lq, D) f32, attention_weights (B, H, Lq, Lk) f32).
    """
    B, Lq, Cq = q_raw.shape
    _, Lk, Ck = k_raw.shape
    D = wq.shape[1]
    assert num_heads * depth == D
    scale = 1.0 / math.sqrt(float(depth))

    bq2 = bq.reshape(1, D)
    bk2 = bk.reshape(1, D)
    bv2 = bv.reshape(1, D)
    bo2 = bo.reshape(1, D)

    # Tile over Lq; tq sized so the (H, tq, Lk) weights block + per-batch K/V
    # stays inside v7x's 64 MiB VMEM.  Sweep upward on v5e/v6e.
    tq = Lq if Lq <= tq_max else tq_max
    grid = (B, pl.cdiv(Lq, tq))

    return pl.pallas_call(
        partial(mha_kernel, num_heads=num_heads, depth=depth, scale=scale),
        out_shape=(
            jax.ShapeDtypeStruct((B, Lq, D), q_raw.dtype),
            jax.ShapeDtypeStruct((B, num_heads, Lq, Lk), jnp.float32),
        ),
        grid=grid,
        in_specs=[
            pl.BlockSpec((1, tq, Cq), lambda b, qi: (b, qi, 0)),   # q rows
            pl.BlockSpec((1, Lk, Ck), lambda b, qi: (b, 0, 0)),    # raw k (per batch)
            pl.BlockSpec((1, Lk, Ck), lambda b, qi: (b, 0, 0)),    # raw v (per batch)
            pl.BlockSpec((Cq, D), lambda b, qi: (0, 0)),           # wq (bf16)
            pl.BlockSpec((1, D), lambda b, qi: (0, 0)),            # bq
            pl.BlockSpec((Ck, D), lambda b, qi: (0, 0)),           # wk (bf16)
            pl.BlockSpec((1, D), lambda b, qi: (0, 0)),            # bk
            pl.BlockSpec((Ck, D), lambda b, qi: (0, 0)),           # wv (bf16)
            pl.BlockSpec((1, D), lambda b, qi: (0, 0)),            # bv
            pl.BlockSpec((D, D), lambda b, qi: (0, 0)),            # wo (bf16)
            pl.BlockSpec((1, D), lambda b, qi: (0, 0)),            # bo
        ],
        out_specs=(
            pl.BlockSpec((1, tq, D), lambda b, qi: (b, qi, 0)),               # outputs
            pl.BlockSpec((1, num_heads, tq, Lk), lambda b, qi: (b, 0, qi, 0)),  # weights
        ),
        scratch_shapes=[
            pltpu.VMEM((Lk, D), jnp.float32),   # projected K (per batch, persistent)
            pltpu.VMEM((Lk, D), jnp.float32),   # projected V (per batch, persistent)
            pltpu.VMEM((tq, D), jnp.float32),   # projected (scaled) Q
            pltpu.VMEM((tq, D), jnp.float32),   # concatenated head outputs
        ],
        compiler_params=pltpu.CompilerParams(
            # qi axis is "arbitrary": kp/vp scratch computed at qi == 0 is
            # re-used by later qi steps of the same batch.  The batch axis is
            # "parallel" so v7x's two TensorCores split work when B >= 2.
            dimension_semantics=("parallel", "arbitrary"),
            vmem_limit_bytes=64 * 1024 * 1024,
        ),
    )(q_raw, k_raw, v_raw, wq, bq2, wk, bk2, wv, bv2, wo, bo2)


# ----------------------------------------------------------------------------
# Module wrapper
# ----------------------------------------------------------------------------
class MultiHeadAttentionYG:
    def __init__(self, num_dimensions, num_heads, n_class, key):
        assert num_dimensions % num_heads == 0
        self.num_dimensions = num_dimensions
        self.num_heads = num_heads
        self.depth = num_dimensions // num_heads
        self.n_class = n_class

        ks = jax.random.split(key, 8)

        def init_linear(kw, kb, fan_in, fan_out):
            # mimic torch.nn.Linear default init: U(-1/sqrt(fan_in), 1/sqrt(fan_in))
            bound = 1.0 / math.sqrt(fan_in)
            w = jax.random.uniform(kw, (fan_in, fan_out), jnp.float32, -bound, bound)
            b = jax.random.uniform(kb, (fan_out,), jnp.float32, -bound, bound)
            return w, b

        # f32 master weights (used by the pure-JAX reference) ...
        self.wq = init_linear(ks[0], ks[1], n_class, num_dimensions)
        self.wk = init_linear(ks[2], ks[3], 1024, num_dimensions)
        self.wv = init_linear(ks[4], ks[5], 1024, num_dimensions)
        self.wo = init_linear(ks[6], ks[7], num_dimensions, num_dimensions)
        # ... and bf16 copies fed to the kernel (MXU is bf16-native).
        self.wq_bf = self.wq[0].astype(jnp.bfloat16)
        self.wk_bf = self.wk[0].astype(jnp.bfloat16)
        self.wv_bf = self.wv[0].astype(jnp.bfloat16)
        self.wo_bf = self.wo[0].astype(jnp.bfloat16)

    def __call__(self, q, k, v):
        # Single fused pallas_call: KV proj + Q proj + attention + output proj.
        outputs, attn_weights = fused_mha(
            q, k, v,
            self.wq_bf, self.wq[1],
            self.wk_bf, self.wk[1],
            self.wv_bf, self.wv[1],
            self.wo_bf, self.wo[1],
            num_heads=self.num_heads, depth=self.depth,
        )
        return outputs, attn_weights


# ----------------------------------------------------------------------------
# Pure-JAX reference (f32) for sanity checking
# ----------------------------------------------------------------------------
def reference_forward(mha, q, k, v):
    B, Lq, _ = q.shape
    Lk = k.shape[1]
    D, H, d = mha.num_dimensions, mha.num_heads, mha.depth
    qp = q @ mha.wq[0] + mha.wq[1]
    kp = k @ mha.wk[0] + mha.wk[1]
    vp = v @ mha.wv[0] + mha.wv[1]
    qh = jnp.transpose(qp.reshape(B, Lq, H, d), (0, 2, 1, 3))
    kh = jnp.transpose(kp.reshape(B, Lk, H, d), (0, 2, 1, 3))
    vh = jnp.transpose(vp.reshape(B, Lk, H, d), (0, 2, 1, 3))
    logits = jnp.einsum("bhqd,bhkd->bhqk", qh, kh) / math.sqrt(float(d))
    w = jax.nn.softmax(logits, axis=-1)
    o = jnp.einsum("bhqk,bhkd->bhqd", w, vh)
    concat = jnp.transpose(o, (0, 2, 1, 3)).reshape(B, Lq, D)
    out = concat @ mha.wo[0] + mha.wo[1]
    return out, w


if __name__ == "__main__":
    key = jax.random.PRNGKey(0)
    k_param, k_q, k_k, k_v = jax.random.split(key, 4)

    # Small shapes consistent with the module:
    #   num_dimensions=32, num_heads=2, n_class=8; wk/wv input dim fixed at 1024.
    B, Lq, Lk = 2, 8, 8
    num_dimensions, num_heads, n_class = 32, 2, 8

    mha = MultiHeadAttentionYG(num_dimensions, num_heads, n_class, k_param)

    q = jax.random.normal(k_q, (B, Lq, n_class), dtype=jnp.float32)
    k = jax.random.normal(k_k, (B, Lk, 1024), dtype=jnp.float32)
    v = jax.random.normal(k_v, (B, Lk, 1024), dtype=jnp.float32)

    outputs, attn_weights = mha(q, k, v)
    outputs = jax.block_until_ready(outputs)
    attn_weights = jax.block_until_ready(attn_weights)

    ref_out, ref_w = reference_forward(mha, q, k, v)
    assert outputs.shape == (B, Lq, num_dimensions)
    assert attn_weights.shape == (B, num_heads, Lq, Lk)
    # Tolerances account for bf16 MXU operands (f32 accumulate) in all
    # projections / attention matmuls vs the pure-f32 reference; structural
    # errors would be orders of magnitude larger.
    assert jnp.allclose(outputs, ref_out, atol=2e-2, rtol=2e-2)
    assert jnp.allclose(attn_weights, ref_w, atol=1e-2, rtol=1e-2)

    print("KERNEL_OK")
</pallas_src>

<mosaic_0001>
module attributes {stable_mosaic.version = 11 : i64} {
  func.func @mha_kernel(%arg0: i32, %arg1: i32, %arg2: memref<1x8x8xf32, #tpu.memory_space<vmem>>, %arg3: memref<1x8x1024xf32, #tpu.memory_space<vmem>>, %arg4: memref<1x8x1024xf32, #tpu.memory_space<vmem>>, %arg5: memref<8x32xbf16, #tpu.memory_space<vmem>>, %arg6: memref<1x32xf32, #tpu.memory_space<vmem>>, %arg7: memref<1024x32xbf16, #tpu.memory_space<vmem>>, %arg8: memref<1x32xf32, #tpu.memory_space<vmem>>, %arg9: memref<1024x32xbf16, #tpu.memory_space<vmem>>, %arg10: memref<1x32xf32, #tpu.memory_space<vmem>>, %arg11: memref<32x32xbf16, #tpu.memory_space<vmem>>, %arg12: memref<1x32xf32, #tpu.memory_space<vmem>>, %arg13: memref<1x8x32xf32, #tpu.memory_space<vmem>>, %arg14: memref<1x2x8x8xf32, #tpu.memory_space<vmem>>, %arg15: memref<8x32xf32, #tpu.memory_space<vmem>>, %arg16: memref<8x32xf32, #tpu.memory_space<vmem>>, %arg17: memref<8x32xf32, #tpu.memory_space<vmem>>, %arg18: memref<8x32xf32, #tpu.memory_space<vmem>>) attributes {dimension_semantics = [#tpu.dimension_semantics<parallel>, #tpu.dimension_semantics<arbitrary>], iteration_bounds = array<i64: 2, 1>, scalar_prefetch = 0 : i64, scratch_operands = 4 : i64, tpu.core_type = #tpu.core_type<tc>, window_params = [{transform_indices = @transform_0, window_bounds = array<i64: 1, 8, 8>}, {transform_indices = @transform_1, window_bounds = array<i64: 1, 8, 1024>}, {transform_indices = @transform_2, window_bounds = array<i64: 1, 8, 1024>}, {pipeline_mode = #tpu.pipeline_mode<synchronous>, transform_indices = @transform_3, window_bounds = array<i64: 8, 32>}, {pipeline_mode = #tpu.pipeline_mode<synchronous>, transform_indices = @transform_4, window_bounds = array<i64: 1, 32>}, {pipeline_mode = #tpu.pipeline_mode<synchronous>, transform_indices = @transform_5, window_bounds = array<i64: 1024, 32>}, {pipeline_mode = #tpu.pipeline_mode<synchronous>, transform_indices = @transform_6, window_bounds = array<i64: 1, 32>}, {pipeline_mode = #tpu.pipeline_mode<synchronous>, transform_indices = @transform_7, window_bounds = array<i64: 1024, 32>}, {pipeline_mode = #tpu.pipeline_mode<synchronous>, transform_indices = @transform_8, window_bounds = array<i64: 1, 32>}, {pipeline_mode = #tpu.pipeline_mode<synchronous>, transform_indices = @transform_9, window_bounds = array<i64: 32, 32>}, {pipeline_mode = #tpu.pipeline_mode<synchronous>, transform_indices = @transform_10, window_bounds = array<i64: 1, 32>}, {transform_indices = @transform_11, window_bounds = array<i64: 1, 8, 32>}, {transform_indices = @transform_12, window_bounds = array<i64: 1, 2, 8, 8>}]} {
    %c0_i32 = arith.constant 0 : i32
    %0 = arith.cmpi eq, %arg1, %c0_i32 : i32
    %1 = arith.extui %0 : i1 to i32
    %c0_i32_0 = arith.constant 0 : i32
    %2 = arith.cmpi ne, %1, %c0_i32_0 : i32
    scf.if %2 {
      %c0_50 = arith.constant 0 : index
      %c0_51 = arith.constant 0 : index
      %c0_52 = arith.constant 0 : index
      %68 = vector.load %arg3[%c0_50, %c0_51, %c0_52] : memref<1x8x1024xf32, #tpu.memory_space<vmem>>, vector<1x8x1024xf32>
      %69 = vector.shape_cast %68 : vector<1x8x1024xf32> to vector<8x1024xf32>
      %70 = arith.truncf %69 : vector<8x1024xf32> to vector<8x1024xbf16>
      %c0_53 = arith.constant 0 : index
      %c0_54 = arith.constant 0 : index
      %c0_55 = arith.constant 0 : index
      %71 = vector.load %arg4[%c0_53, %c0_54, %c0_55] : memref<1x8x1024xf32, #tpu.memory_space<vmem>>, vector<1x8x1024xf32>
      %72 = vector.shape_cast %71 : vector<1x8x1024xf32> to vector<8x1024xf32>
      %73 = arith.truncf %72 : vector<8x1024xf32> to vector<8x1024xbf16>
      %c0_56 = arith.constant 0 : index
      %c0_57 = arith.constant 0 : index
      %74 = vector.load %arg7[%c0_56, %c0_57] : memref<1024x32xbf16, #tpu.memory_space<vmem>>, vector<1024x32xbf16>
      %cst_58 = arith.constant dense<0.000000e+00> : vector<8x32xf32>
      %75 = tpu.matmul %70, %74, %cst_58 {dimension_numbers = #tpu.dot_dimension_numbers<[1], [0], [0], [1], [0, 0, 1, 1], [], []>} : vector<8x1024xbf16>, vector<1024x32xbf16>, vector<8x32xf32> -> vector<8x32xf32>
      %c0_59 = arith.constant 0 : index
      %c0_60 = arith.constant 0 : index
      %76 = vector.load %arg8[%c0_59, %c0_60] : memref<1x32xf32, #tpu.memory_space<vmem>>, vector<1x32xf32>
      %77 = vector.broadcast %76 : vector<1x32xf32> to vector<8x32xf32>
      %78 = arith.addf %75, %77 : vector<8x32xf32>
      %c0_61 = arith.constant 0 : index
      %c0_62 = arith.constant 0 : index
      %79 = vector.load %arg15[%c0_61, %c0_62] : memref<8x32xf32, #tpu.memory_space<vmem>>, vector<8x32xf32>
      tpu.vector_store %arg15[%c0_61, %c0_62], %78 {strides = array<i32>} : memref<8x32xf32, #tpu.memory_space<vmem>>, vector<8x32xf32>,
      %c0_63 = arith.constant 0 : index
      %c0_64 = arith.constant 0 : index
      %80 = vector.load %arg9[%c0_63, %c0_64] : memref<1024x32xbf16, #tpu.memory_space<vmem>>, vector<1024x32xbf16>
      %cst_65 = arith.constant dense<0.000000e+00> : vector<8x32xf32>
      %81 = tpu.matmul %73, %80, %cst_65 {dimension_numbers = #tpu.dot_dimension_numbers<[1], [0], [0], [1], [0, 0, 1, 1], [], []>} : vector<8x1024xbf16>, vector<1024x32xbf16>, vector<8x32xf32> -> vector<8x32xf32>
      %c0_66 = arith.constant 0 : index
      %c0_67 = arith.constant 0 : index
      %82 = vector.load %arg10[%c0_66, %c0_67] : memref<1x32xf32, #tpu.memory_space<vmem>>, vector<1x32xf32>
      %83 = vector.broadcast %82 : vector<1x32xf32> to vector<8x32xf32>
      %84 = arith.addf %81, %83 : vector<8x32xf32>
      %c0_68 = arith.constant 0 : index
      %c0_69 = arith.constant 0 : index
      %85 = vector.load %arg16[%c0_68, %c0_69] : memref<8x32xf32, #tpu.memory_space<vmem>>, vector<8x32xf32>
      tpu.vector_store %arg16[%c0_68, %c0_69], %84 {strides = array<i32>} : memref<8x32xf32, #tpu.memory_space<vmem>>, vector<8x32xf32>,
    } else {
    }
    %c0 = arith.constant 0 : index
    %c0_1 = arith.constant 0 : index
    %c0_2 = arith.constant 0 : index
    %3 = vector.load %arg2[%c0, %c0_1, %c0_2] : memref<1x8x8xf32, #tpu.memory_space<vmem>>, vector<1x8x8xf32>
    %4 = vector.shape_cast %3 : vector<1x8x8xf32> to vector<8x8xf32>
    %5 = arith.truncf %4 : vector<8x8xf32> to vector<8x8xbf16>
    %c0_3 = arith.constant 0 : index
    %c0_4 = arith.constant 0 : index
    %6 = vector.load %arg5[%c0_3, %c0_4] : memref<8x32xbf16, #tpu.memory_space<vmem>>, vector<8x32xbf16>
    %cst = arith.constant dense<0.000000e+00> : vector<8x32xf32>
    %7 = tpu.matmul %5, %6, %cst {dimension_numbers = #tpu.dot_dimension_numbers<[1], [0], [0], [1], [0, 0, 1, 1], [], []>} : vector<8x8xbf16>, vector<8x32xbf16>, vector<8x32xf32> -> vector<8x32xf32>
    %c0_5 = arith.constant 0 : index
    %c0_6 = arith.constant 0 : index
    %8 = vector.load %arg6[%c0_5, %c0_6] : memref<1x32xf32, #tpu.memory_space<vmem>>, vector<1x32xf32>
    %9 = vector.broadcast %8 : vector<1x32xf32> to vector<8x32xf32>
    %10 = arith.addf %7, %9 : vector<8x32xf32>
    %cst_7 = arith.constant 2.500000e-01 : f32
    %11 = vector.broadcast %cst_7 : f32 to vector<8x32xf32>
    %12 = arith.mulf %10, %11 : vector<8x32xf32>
    %c0_8 = arith.constant 0 : index
    %c0_9 = arith.constant 0 : index
    %13 = vector.load %arg17[%c0_8, %c0_9] : memref<8x32xf32, #tpu.memory_space<vmem>>, vector<8x32xf32>
    tpu.vector_store %arg17[%c0_8, %c0_9], %12 {strides = array<i32>} : memref<8x32xf32, #tpu.memory_space<vmem>>, vector<8x32xf32>,
    %c0_10 = arith.constant 0 : index
    %c0_11 = arith.constant 0 : index
    %14 = vector.load %arg17[%c0_10, %c0_11] : memref<8x32xf32, #tpu.memory_space<vmem>>, vector<8x16xf32>
    %15 = arith.truncf %14 : vector<8x16xf32> to vector<8x16xbf16>
    %c0_12 = arith.constant 0 : index
    %c0_13 = arith.constant 0 : index
    %16 = vector.load %arg15[%c0_12, %c0_13] : memref<8x32xf32, #tpu.memory_space<vmem>>, vector<8x16xf32>
    %17 = arith.truncf %16 : vector<8x16xf32> to vector<8x16xbf16>
    %c0_14 = arith.constant 0 : index
    %c0_15 = arith.constant 0 : index
    %18 = vector.load %arg16[%c0_14, %c0_15] : memref<8x32xf32, #tpu.memory_space<vmem>>, vector<8x16xf32>
    %19 = arith.truncf %18 : vector<8x16xf32> to vector<8x16xbf16>
    %cst_16 = arith.constant dense<0.000000e+00> : vector<8x8xf32>
    %20 = tpu.matmul %15, %17, %cst_16 {dimension_numbers = #tpu.dot_dimension_numbers<[1], [1], [0], [0], [0, 0, 1, 0], [], []>} : vector<8x16xbf16>, vector<8x16xbf16>, vector<8x8xf32> -> vector<8x8xf32>
    %cst_17 = arith.constant dense<0xFF800000> : vector<8xf32>
    %21 = vector.multi_reduction <maximumf>, %20, %cst_17 [1] : vector<8x8xf32> to vector<8xf32>
    %22 = vector.shape_cast %21 : vector<8xf32> to vector<8x1xf32>
    %23 = vector.broadcast %22 : vector<8x1xf32> to vector<8x8xf32>
    %24 = arith.subf %20, %23 : vector<8x8xf32>
    %25 = math.exp %24 : vector<8x8xf32>
    %cst_18 = arith.constant dense<0.000000e+00> : vector<8xf32>
    %26 = vector.multi_reduction <add>, %25, %cst_18 [1] : vector<8x8xf32> to vector<8xf32>
    %27 = vector.shape_cast %26 : vector<8xf32> to vector<8x1xf32>
    %28 = vector.broadcast %27 : vector<8x1xf32> to vector<8x8xf32>
    %29 = arith.divf %25, %28 : vector<8x8xf32>
    %c0_19 = arith.constant 0 : index
    %c0_20 = arith.constant 0 : index
    %c0_21 = arith.constant 0 : index
    %c0_22 = arith.constant 0 : index
    %30 = vector.load %arg14[%c0_19, %c0_20, %c0_21, %c0_22] : memref<1x2x8x8xf32, #tpu.memory_space<vmem>>, vector<1x1x8x8xf32>
    %31 = vector.shape_cast %30 : vector<1x1x8x8xf32> to vector<8x8xf32>
    %32 = vector.shape_cast %29 : vector<8x8xf32> to vector<1x1x8x8xf32>
    tpu.vector_store %arg14[%c0_19, %c0_20, %c0_21, %c0_22], %32 {strides = array<i32>} : memref<1x2x8x8xf32, #tpu.memory_space<vmem>>, vector<1x1x8x8xf32>,
    %33 = arith.truncf %29 : vector<8x8xf32> to vector<8x8xbf16>
    %cst_23 = arith.constant dense<0.000000e+00> : vector<8x16xf32>
    %34 = tpu.matmul %33, %19, %cst_23 {dimension_numbers = #tpu.dot_dimension_numbers<[1], [0], [0], [1], [0, 0, 1, 1], [], []>} : vector<8x8xbf16>, vector<8x16xbf16>, vector<8x16xf32> -> vector<8x16xf32>
    %c0_24 = arith.constant 0 : index
    %c0_25 = arith.constant 0 : index
    %35 = vector.load %arg18[%c0_24, %c0_25] : memref<8x32xf32, #tpu.memory_space<vmem>>, vector<8x16xf32>
    tpu.vector_store %arg18[%c0_24, %c0_25], %34 {strides = array<i32>} : memref<8x32xf32, #tpu.memory_space<vmem>>, vector<8x16xf32>,
    %c0_26 = arith.constant 0 : index
    %c16 = arith.constant 16 : index
    %36 = vector.load %arg17[%c0_26, %c16] : memref<8x32xf32, #tpu.memory_space<vmem>>, vector<8x16xf32>
    %37 = arith.truncf %36 : vector<8x16xf32> to vector<8x16xbf16>
    %c0_27 = arith.constant 0 : index
    %c16_28 = arith.constant 16 : index
    %38 = vector.load %arg15[%c0_27, %c16_28] : memref<8x32xf32, #tpu.memory_space<vmem>>, vector<8x16xf32>
    %39 = arith.truncf %38 : vector<8x16xf32> to vector<8x16xbf16>
    %c0_29 = arith.constant 0 : index
    %c16_30 = arith.constant 16 : index
    %40 = vector.load %arg16[%c0_29, %c16_30] : memref<8x32xf32, #tpu.memory_space<vmem>>, vector<8x16xf32>
    %41 = arith.truncf %40 : vector<8x16xf32> to vector<8x16xbf16>
    %cst_31 = arith.constant dense<0.000000e+00> : vector<8x8xf32>
    %42 = tpu.matmul %37, %39, %cst_31 {dimension_numbers = #tpu.dot_dimension_numbers<[1], [1], [0], [0], [0, 0, 1, 0], [], []>} : vector<8x16xbf16>, vector<8x16xbf16>, vector<8x8xf32> -> vector<8x8xf32>
    %cst_32 = arith.constant dense<0xFF800000> : vector<8xf32>
    %43 = vector.multi_reduction <maximumf>, %42, %cst_32 [1] : vector<8x8xf32> to vector<8xf32>
    %44 = vector.shape_cast %43 : vector<8xf32> to vector<8x1xf32>
    %45 = vector.broadcast %44 : vector<8x1xf32> to vector<8x8xf32>
    %46 = arith.subf %42, %45 : vector<8x8xf32>
    %47 = math.exp %46 : vector<8x8xf32>
    %cst_33 = arith.constant dense<0.000000e+00> : vector<8xf32>
    %48 = vector.multi_reduction <add>, %47, %cst_33 [1] : vector<8x8xf32> to vector<8xf32>
    %49 = vector.shape_cast %48 : vector<8xf32> to vector<8x1xf32>
    %50 = vector.broadcast %49 : vector<8x1xf32> to vector<8x8xf32>
    %51 = arith.divf %47, %50 : vector<8x8xf32>
    %c0_34 = arith.constant 0 : index
    %c1 = arith.constant 1 : index
    %c0_35 = arith.constant 0 : index
    %c0_36 = arith.constant 0 : index
    %52 = vector.load %arg14[%c0_34, %c1, %c0_35, %c0_36] : memref<1x2x8x8xf32, #tpu.memory_space<vmem>>, vector<1x1x8x8xf32>
    %53 = vector.shape_cast %52 : vector<1x1x8x8xf32> to vector<8x8xf32>
    %54 = vector.shape_cast %51 : vector<8x8xf32> to vector<1x1x8x8xf32>
    tpu.vector_store %arg14[%c0_34, %c1, %c0_35, %c0_36], %54 {strides = array<i32>} : memref<1x2x8x8xf32, #tpu.memory_space<vmem>>, vector<1x1x8x8xf32>,
    %55 = arith.truncf %51 : vector<8x8xf32> to vector<8x8xbf16>
    %cst_37 = arith.constant dense<0.000000e+00> : vector<8x16xf32>
    %56 = tpu.matmul %55, %41, %cst_37 {dimension_numbers = #tpu.dot_dimension_numbers<[1], [0], [0], [1], [0, 0, 1, 1], [], []>} : vector<8x8xbf16>, vector<8x16xbf16>, vector<8x16xf32> -> vector<8x16xf32>
    %c0_38 = arith.constant 0 : index
    %c16_39 = arith.constant 16 : index
    %57 = vector.load %arg18[%c0_38, %c16_39] : memref<8x32xf32, #tpu.memory_space<vmem>>, vector<8x16xf32>
    tpu.vector_store %arg18[%c0_38, %c16_39], %56 {strides = array<i32>} : memref<8x32xf32, #tpu.memory_space<vmem>>, vector<8x16xf32>,
    %c0_40 = arith.constant 0 : index
    %c0_41 = arith.constant 0 : index
    %58 = vector.load %arg18[%c0_40, %c0_41] : memref<8x32xf32, #tpu.memory_space<vmem>>, vector<8x32xf32>
    %59 = arith.truncf %58 : vector<8x32xf32> to vector<8x32xbf16>
    %c0_42 = arith.constant 0 : index
    %c0_43 = arith.constant 0 : index
    %60 = vector.load %arg11[%c0_42, %c0_43] : memref<32x32xbf16, #tpu.memory_space<vmem>>, vector<32x32xbf16>
    %cst_44 = arith.constant dense<0.000000e+00> : vector<8x32xf32>
    %61 = tpu.matmul %59, %60, %cst_44 {dimension_numbers = #tpu.dot_dimension_numbers<[1], [0], [0], [1], [0, 0, 1, 1], [], []>} : vector<8x32xbf16>, vector<32x32xbf16>, vector<8x32xf32> -> vector<8x32xf32>
    %c0_45 = arith.constant 0 : index
    %c0_46 = arith.constant 0 : index
    %62 = vector.load %arg12[%c0_45, %c0_46] : memref<1x32xf32, #tpu.memory_space<vmem>>, vector<1x32xf32>
    %63 = vector.broadcast %62 : vector<1x32xf32> to vector<8x32xf32>
    %64 = arith.addf %61, %63 : vector<8x32xf32>
    %c0_47 = arith.constant 0 : index
    %c0_48 = arith.constant 0 : index
    %c0_49 = arith.constant 0 : index
    %65 = vector.load %arg13[%c0_47, %c0_48, %c0_49] : memref<1x8x32xf32, #tpu.memory_space<vmem>>, vector<1x8x32xf32>
    %66 = vector.shape_cast %65 : vector<1x8x32xf32> to vector<8x32xf32>
    %67 = vector.shape_cast %64 : vector<8x32xf32> to vector<1x8x32xf32>
    tpu.vector_store %arg13[%c0_47, %c0_48, %c0_49], %67 {strides = array<i32>} : memref<1x8x32xf32, #tpu.memory_space<vmem>>, vector<1x8x32xf32>,
    return
  }
  func.func @transform_0(%arg0: i32, %arg1: i32) -> (i32, i32, i32) {
    %c0_i32 = arith.constant 0 : i32
    %c0_i32_0 = arith.constant 0 : i32
    return %arg0, %arg1, %c0_i32 : i32, i32, i32
  }
  func.func @transform_1(%arg0: i32, %arg1: i32) -> (i32, i32, i32) {
    %c0_i32 = arith.constant 0 : i32
    %c0_i32_0 = arith.constant 0 : i32
    %c0_i32_1 = arith.constant 0 : i32
    return %arg0, %c0_i32, %c0_i32_0 : i32, i32, i32
  }
  func.func @transform_2(%arg0: i32, %arg1: i32) -> (i32, i32, i32) {
    %c0_i32 = arith.constant 0 : i32
    %c0_i32_0 = arith.constant 0 : i32
    %c0_i32_1 = arith.constant 0 : i32
    return %arg0, %c0_i32, %c0_i32_0 : i32, i32, i32
  }
  func.func @transform_3(%arg0: i32, %arg1: i32) -> (i32, i32) {
    %c0_i32 = arith.constant 0 : i32
    %c0_i32_0 = arith.constant 0 : i32
    %c0_i32_1 = arith.constant 0 : i32
    return %c0_i32, %c0_i32_0 : i32, i32
  }
  func.func @transform_4(%arg0: i32, %arg1: i32) -> (i32, i32) {
    %c0_i32 = arith.constant 0 : i32
    %c0_i32_0 = arith.constant 0 : i32
    %c0_i32_1 = arith.constant 0 : i32
    return %c0_i32, %c0_i32_0 : i32, i32
  }
  func.func @transform_5(%arg0: i32, %arg1: i32) -> (i32, i32) {
    %c0_i32 = arith.constant 0 : i32
    %c0_i32_0 = arith.constant 0 : i32
    %c0_i32_1 = arith.constant 0 : i32
    return %c0_i32, %c0_i32_0 : i32, i32
  }
  func.func @transform_6(%arg0: i32, %arg1: i32) -> (i32, i32) {
    %c0_i32 = arith.constant 0 : i32
    %c0_i32_0 = arith.constant 0 : i32
    %c0_i32_1 = arith.constant 0 : i32
    return %c0_i32, %c0_i32_0 : i32, i32
  }
  func.func @transform_7(%arg0: i32, %arg1: i32) -> (i32, i32) {
    %c0_i32 = arith.constant 0 : i32
    %c0_i32_0 = arith.constant 0 : i32
    %c0_i32_1 = arith.constant 0 : i32
    return %c0_i32, %c0_i32_0 : i32, i32
  }
  func.func @transform_8(%arg0: i32, %arg1: i32) -> (i32, i32) {
    %c0_i32 = arith.constant 0 : i32
    %c0_i32_0 = arith.constant 0 : i32
    %c0_i32_1 = arith.constant 0 : i32
    return %c0_i32, %c0_i32_0 : i32, i32
  }
  func.func @transform_9(%arg0: i32, %arg1: i32) -> (i32, i32) {
    %c0_i32 = arith.constant 0 : i32
    %c0_i32_0 = arith.constant 0 : i32
    %c0_i32_1 = arith.constant 0 : i32
    return %c0_i32, %c0_i32_0 : i32, i32
  }
  func.func @transform_10(%arg0: i32, %arg1: i32) -> (i32, i32) {
    %c0_i32 = arith.constant 0 : i32
    %c0_i32_0 = arith.constant 0 : i32
    %c0_i32_1 = arith.constant 0 : i32
    return %c0_i32, %c0_i32_0 : i32, i32
  }
  func.func @transform_11(%arg0: i32, %arg1: i32) -> (i32, i32, i32) {
    %c0_i32 = arith.constant 0 : i32
    %c0_i32_0 = arith.constant 0 : i32
    return %arg0, %arg1, %c0_i32 : i32, i32, i32
  }
  func.func @transform_12(%arg0: i32, %arg1: i32) -> (i32, i32, i32, i32) {
    %c0_i32 = arith.constant 0 : i32
    %c0_i32_0 = arith.constant 0 : i32
    %c0_i32_1 = arith.constant 0 : i32
    return %arg0, %c0_i32, %arg1, %c0_i32_0 : i32, i32, i32, i32
  }
}

</mosaic_0001>

<llo_original>
// kernel: tpu_custom_call.1
$region0: #{tpu_custom_call.1}
  #allocation0 [shape = 'u32[]', space=smem, size = 0x4, offset = 0x4, fixed_abs, tag = 'smem constant byte address 0x4 - core index']
  #allocation1 [shape = 'u32[72,128]{1,0:T(1,128)}', space=vmem, size = 0x9000, scoped, tag = 'internal scratch']
  #allocation2 [shape = 'f32[8,32]{1,0:T(8,128)}', space=vmem, size = 0x1000, scoped, tag = 'scratch operand']
  #allocation3 [shape = 'f32[8,32]{1,0:T(8,128)}', space=vmem, size = 0x1000, scoped, tag = 'scratch operand']
  #allocation4 [shape = 'f32[8,32]{1,0:T(8,128)}', space=vmem, size = 0x1000, scoped, tag = 'scratch operand']
  #allocation5 [shape = 'f32[8,32]{1,0:T(8,128)}', space=vmem, size = 0x1000, scoped, tag = 'scratch operand']
  %s0 = inlined_call_operand.vmem [shape: f32[2,8,8], index: 0, kind: input, shape index: {}]
  %s1 = inlined_call_operand.vmem [shape: f32[2,8,1024], index: 1, kind: input, shape index: {}]
  %s2 = inlined_call_operand.vmem [shape: f32[2,8,1024], index: 2, kind: input, shape index: {}]
  %s3 = inlined_call_operand.vmem [shape: bf16[8,32], index: 3, kind: input, shape index: {}]
  %s4 = inlined_call_operand.vmem [shape: f32[1,32], index: 4, kind: input, shape index: {}]
  %s5 = inlined_call_operand.vmem [shape: bf16[1024,32], index: 5, kind: input, shape index: {}]
  %s6 = inlined_call_operand.vmem [shape: f32[1,32], index: 6, kind: input, shape index: {}]
  %s7 = inlined_call_operand.vmem [shape: bf16[1024,32], index: 7, kind: input, shape index: {}]
  %s8 = inlined_call_operand.vmem [shape: f32[1,32], index: 8, kind: input, shape index: {}]
  %s9 = inlined_call_operand.vmem [shape: bf16[32,32], index: 9, kind: input, shape index: {}]
  %s10 = inlined_call_operand.vmem [shape: f32[1,32], index: 10, kind: input, shape index: {}]
  %s11 = inlined_call_operand.hbm [shape: f32[2,8,32], index: 11, kind: output, shape index: {0}]
  %s12 = inlined_call_operand.hbm [shape: f32[2,2,8,8], index: 12, kind: output, shape index: {1}]
  %13 = xla_tuple %s11, %s12
  %s14 = sld [smem:[#allocation0]]
  $region89: #{tpu_custom_call.1} parent=0
    _
  %s16 = ssub.s32 1, %s14
  %s17 = scalar_select 0, %s16, %s14
  $region1: #{tpu_custom_call.1} parent=0
    #allocation6 [shape = 'u8[8192]{0}', space=vmem, size = 0x2000, scoped, tag = 'output window, operand 0']
    #allocation7 [shape = 's32[2]{0}', space=sflag, size = 0x8, scoped, tag = 'scoped memory for tpu_custom_call.1']
    #allocation8 [shape = 'u8[16384]{0}', space=vmem, size = 0x4000, scoped, tag = 'output window, operand 1']
    #allocation9 [shape = 's32[2]{0}', space=sflag, size = 0x8, scoped, tag = 'scoped memory for tpu_custom_call.1']
    %18 = vsyncpa [#allocation7], 0
    %s19 = scalar_lea.sflag [#allocation7], 1
    %20 = vsyncpa %s19, 0
    %21 = vsyncpa [#allocation9], 0
    %s22 = scalar_lea.sflag [#allocation9], 1
    %23 = vsyncpa %s22, 0
    loop: start=0, step=1, limit=4
    $region2: #{tpu_custom_call.1} parent=1 // loop_pre_header
      _
    $region3: #{tpu_custom_call.1} parent=1 // loop_header
      %s25 = sphi 0, %s29
      %p26 = scmp.ge.s32.totalorder %s25, 4
      %s32 = sphi 0, %s44
      %s33 = sphi 0, %s40
      %s34 = sphi 0, %s32
      %s35 = sphi 0, %s33
      %s36 = sphi 0, %s34
      %s37 = sphi 0, %s35
      %s49 = sphi 0, %s51
      %s52 = sphi 0, %s49
      %s53 = sphi 0, %s52
      %s69 = sphi 0, %s53
      %s75 = sphi 0, %s77
      %s78 = sphi 0, %s75
      %s79 = sphi 0, %s78
      %s95 = sphi 0, %s79
      %s101 = sphi 0, %s103
      %s104 = sphi 0, %s101
      %s105 = sphi 0, %s104
      %s121 = sphi 0, %s105
      %s125 = sphi 0, %s125
      %s127 = sphi 0, %s125
      %s128 = sphi 0, %s127
      %s142 = sphi 0, %s128
      %s146 = sphi 0, %s146
      %s148 = sphi 0, %s146
      %s149 = sphi 0, %s148
      %s163 = sphi 0, %s149
      %s167 = sphi 0, %s167
      %s169 = sphi 0, %s167
      %s170 = sphi 0, %s169
      %s184 = sphi 0, %s170
      %s188 = sphi 0, %s188
      %s190 = sphi 0, %s188
      %s191 = sphi 0, %s190
      %s205 = sphi 0, %s191
      %s209 = sphi 0, %s209
      %s211 = sphi 0, %s209
      %s212 = sphi 0, %s211
      %s226 = sphi 0, %s212
      %s230 = sphi 0, %s230
      %s232 = sphi 0, %s230
      %s233 = sphi 0, %s232
      %s247 = sphi 0, %s233
      %s251 = sphi 0, %s251
      %s253 = sphi 0, %s251
      %s254 = sphi 0, %s253
      %s268 = sphi 0, %s254
      %s272 = sphi 0, %s272
      %s274 = sphi 0, %s272
      %s275 = sphi 0, %s274
      %s289 = sphi 0, %s275
      %s297 = sphi 0, %s299
      %s300 = sphi 0, %s297
      %s301 = sphi 0, %s300
      %s317 = sphi 0, %s301
      %s325 = sphi 0, %s327
      %s328 = sphi 0, %s325
      %s329 = sphi 0, %s328
      %s345 = sphi 0, %s329
    $region4: #{tpu_custom_call.1} parent=1 // loop_header_branch
      %28 = sbr.rel (%p26) target = $region8
    $region5: #{tpu_custom_call.1} parent=1 // loop_body
      %s30 = ssub.s32 %s25, 1
      %s31 = ssub.s32 %s25, 2
      %s38 = sadd.s32 1, %s33
      %p39 = scmp.ge.s32.totalorder %s38, 1
      %s40 = scalar_select %p39, 0, %s38
      %s41 = sadd.s32 1, %s32
      %s42 = scalar_select %p39, %s41, %s32
      %p43 = scmp.ge.s32.totalorder %s42, 2
      %s44 = scalar_select %p43, 0, %s42
      %s45 = ssub.s32 %s32, %s44
      %s46 = ssub.s32 %s33, %s40
      %s47 = sor.u32 %s45, %s46
      %p48 = scmp.eq.s32.totalorder %s47, 0
      %s50 = sadd.s32 %s49, 1
      %s51 = scalar_select %p48, %s49, %s50
      %p54 = pneg %p48
      %p55 = scmp.eq.s32.totalorder %s25, 1
      %p56 = por %p54, %p55
      %p57 = scmp.ne.s32.totalorder %s49, %s52
      %p58 = scmp.eq.s32.totalorder %s25, 0
      %p59 = por %p57, %p58
      %p60 = scmp.ne.s32.totalorder %s49, %s52
      %p61 = scmp.eq.s32.totalorder %s30, 1
      %p62 = por %p60, %p61
      %p63 = scmp.ne.s32.totalorder %s52, %s53
      %p64 = scmp.eq.s32.totalorder %s30, 0
      %p65 = por %p63, %p64
      %p66 = scmp.ne.s32.totalorder %s52, %s53
      %p67 = scmp.eq.s32.totalorder %s31, 1
      %p68 = por %p66, %p67
      %p70 = scmp.ne.s32.totalorder %s53, %s69
      %p71 = scmp.eq.s32.totalorder %s31, 0
      %p72 = por %p70, %p71
      %s73 = ssub.s32 %s32, %s44
      %p74 = scmp.eq.s32.totalorder %s73, 0
      %s76 = sadd.s32 %s75, 1
      %s77 = scalar_select %p74, %s75, %s76
      %p80 = pneg %p74
      %p81 = scmp.eq.s32.totalorder %s25, 1
      %p82 = por %p80, %p81
      %p83 = scmp.ne.s32.totalorder %s75, %s78
      %p84 = scmp.eq.s32.totalorder %s25, 0
      %p85 = por %p83, %p84
      %p86 = scmp.ne.s32.totalorder %s75, %s78
      %p87 = scmp.eq.s32.totalorder %s30, 1
      %p88 = por %p86, %p87
      %p89 = scmp.ne.s32.totalorder %s78, %s79
      %p90 = scmp.eq.s32.totalorder %s30, 0
      %p91 = por %p89, %p90
      %p92 = scmp.ne.s32.totalorder %s78, %s79
      %p93 = scmp.eq.s32.totalorder %s31, 1
      %p94 = por %p92, %p93
      %p96 = scmp.ne.s32.totalorder %s79, %s95
      %p97 = scmp.eq.s32.totalorder %s31, 0
      %p98 = por %p96, %p97
      %s99 = ssub.s32 %s32, %s44
      %p100 = scmp.eq.s32.totalorder %s99, 0
      %s102 = sadd.s32 %s101, 1
      %s103 = scalar_select %p100, %s101, %s102
      %p106 = pneg %p100
      %p107 = scmp.eq.s32.totalorder %s25, 1
      %p108 = por %p106, %p107
      %p109 = scmp.ne.s32.totalorder %s101, %s104
      %p110 = scmp.eq.s32.totalorder %s25, 0
      %p111 = por %p109, %p110
      %p112 = scmp.ne.s32.totalorder %s101, %s104
      %p113 = scmp.eq.s32.totalorder %s30, 1
      %p114 = por %p112, %p113
      %p115 = scmp.ne.s32.totalorder %s104, %s105
      %p116 = scmp.eq.s32.totalorder %s30, 0
      %p117 = por %p115, %p116
      %p118 = scmp.ne.s32.totalorder %s104, %s105
      %p119 = scmp.eq.s32.totalorder %s31, 1
      %p120 = por %p118, %p119
      %p122 = scmp.ne.s32.totalorder %s105, %s121
      %p123 = scmp.eq.s32.totalorder %s31, 0
      %p124 = por %p122, %p123
      %s126 = sadd.s32 %s125, 1
      %p129 = scmp.eq.s32.totalorder %s25, 1
      %p130 = scmp.ne.s32.totalorder %s125, %s127
      %p131 = scmp.eq.s32.totalorder %s25, 0
      %p132 = por %p130, %p131
      %p133 = scmp.ne.s32.totalorder %s125, %s127
      %p134 = scmp.eq.s32.totalorder %s30, 1
      %p135 = por %p133, %p134
      %p136 = scmp.ne.s32.totalorder %s127, %s128
      %p137 = scmp.eq.s32.totalorder %s30, 0
      %p138 = por %p136, %p137
      %p139 = scmp.ne.s32.totalorder %s127, %s128
      %p140 = scmp.eq.s32.totalorder %s31, 1
      %p141 = por %p139, %p140
      %p143 = scmp.ne.s32.totalorder %s128, %s142
      %p144 = scmp.eq.s32.totalorder %s31, 0
      %p145 = por %p143, %p144
      %s147 = sadd.s32 %s146, 1
      %p150 = scmp.eq.s32.totalorder %s25, 1
      %p151 = scmp.ne.s32.totalorder %s146, %s148
      %p152 = scmp.eq.s32.totalorder %s25, 0
      %p153 = por %p151, %p152
      %p154 = scmp.ne.s32.totalorder %s146, %s148
      %p155 = scmp.eq.s32.totalorder %s30, 1
      %p156 = por %p154, %p155
      %p157 = scmp.ne.s32.totalorder %s148, %s149
      %p158 = scmp.eq.s32.totalorder %s30, 0
      %p159 = por %p157, %p158
      %p160 = scmp.ne.s32.totalorder %s148, %s149
      %p161 = scmp.eq.s32.totalorder %s31, 1
      %p162 = por %p160, %p161
      %p164 = scmp.ne.s32.totalorder %s149, %s163
      %p165 = scmp.eq.s32.totalorder %s31, 0
      %p166 = por %p164, %p165
      %s168 = sadd.s32 %s167, 1
      %p171 = scmp.eq.s32.totalorder %s25, 1
      %p172 = scmp.ne.s32.totalorder %s167, %s169
      %p173 = scmp.eq.s32.totalorder %s25, 0
      %p174 = por %p172, %p173
      %p175 = scmp.ne.s32.totalorder %s167, %s169
      %p176 = scmp.eq.s32.totalorder %s30, 1
      %p177 = por %p175, %p176
      %p178 = scmp.ne.s32.totalorder %s169, %s170
      %p179 = scmp.eq.s32.totalorder %s30, 0
      %p180 = por %p178, %p179
      %p181 = scmp.ne.s32.totalorder %s169, %s170
      %p182 = scmp.eq.s32.totalorder %s31, 1
      %p183 = por %p181, %p182
      %p185 = scmp.ne.s32.totalorder %s170, %s184
      %p186 = scmp.eq.s32.totalorder %s31, 0
      %p187 = por %p185, %p186
      %s189 = sadd.s32 %s188, 1
      %p192 = scmp.eq.s32.totalorder %s25, 1
      %p193 = scmp.ne.s32.totalorder %s188, %s190
      %p194 = scmp.eq.s32.totalorder %s25, 0
      %p195 = por %p193, %p194
      %p196 = scmp.ne.s32.totalorder %s188, %s190
      %p197 = scmp.eq.s32.totalorder %s30, 1
      %p198 = por %p196, %p197
      %p199 = scmp.ne.s32.totalorder %s190, %s191
      %p200 = scmp.eq.s32.totalorder %s30, 0
      %p201 = por %p199, %p200
      %p202 = scmp.ne.s32.totalorder %s190, %s191
      %p203 = scmp.eq.s32.totalorder %s31, 1
      %p204 = por %p202, %p203
      %p206 = scmp.ne.s32.totalorder %s191, %s205
      %p207 = scmp.eq.s32.totalorder %s31, 0
      %p208 = por %p206, %p207
      %s210 = sadd.s32 %s209, 1
      %p213 = scmp.eq.s32.totalorder %s25, 1
      %p214 = scmp.ne.s32.totalorder %s209, %s211
      %p215 = scmp.eq.s32.totalorder %s25, 0
      %p216 = por %p214, %p215
      %p217 = scmp.ne.s32.totalorder %s209, %s211
      %p218 = scmp.eq.s32.totalorder %s30, 1
      %p219 = por %p217, %p218
      %p220 = scmp.ne.s32.totalorder %s211, %s212
      %p221 = scmp.eq.s32.totalorder %s30, 0
      %p222 = por %p220, %p221
      %p223 = scmp.ne.s32.totalorder %s211, %s212
      %p224 = scmp.eq.s32.totalorder %s31, 1
      %p225 = por %p223, %p224
      %p227 = scmp.ne.s32.totalorder %s212, %s226
      %p228 = scmp.eq.s32.totalorder %s31, 0
      %p229 = por %p227, %p228
      %s231 = sadd.s32 %s230, 1
      %p234 = scmp.eq.s32.totalorder %s25, 1
      %p235 = scmp.ne.s32.totalorder %s230, %s232
      %p236 = scmp.eq.s32.totalorder %s25, 0
      %p237 = por %p235, %p236
      %p238 = scmp.ne.s32.totalorder %s230, %s232
      %p239 = scmp.eq.s32.totalorder %s30, 1
      %p240 = por %p238, %p239
      %p241 = scmp.ne.s32.totalorder %s232, %s233
      %p242 = scmp.eq.s32.totalorder %s30, 0
      %p243 = por %p241, %p242
      %p244 = scmp.ne.s32.totalorder %s232, %s233
      %p245 = scmp.eq.s32.totalorder %s31, 1
      %p246 = por %p244, %p245
      %p248 = scmp.ne.s32.totalorder %s233, %s247
      %p249 = scmp.eq.s32.totalorder %s31, 0
      %p250 = por %p248, %p249
      %s252 = sadd.s32 %s251, 1
      %p255 = scmp.eq.s32.totalorder %s25, 1
      %p256 = scmp.ne.s32.totalorder %s251, %s253
      %p257 = scmp.eq.s32.totalorder %s25, 0
      %p258 = por %p256, %p257
      %p259 = scmp.ne.s32.totalorder %s251, %s253
      %p260 = scmp.eq.s32.totalorder %s30, 1
      %p261 = por %p259, %p260
      %p262 = scmp.ne.s32.totalorder %s253, %s254
      %p263 = scmp.eq.s32.totalorder %s30, 0
      %p264 = por %p262, %p263
      %p265 = scmp.ne.s32.totalorder %s253, %s254
      %p266 = scmp.eq.s32.totalorder %s31, 1
      %p267 = por %p265, %p266
      %p269 = scmp.ne.s32.totalorder %s254, %s268
      %p270 = scmp.eq.s32.totalorder %s31, 0
      %p271 = por %p269, %p270
      %s273 = sadd.s32 %s272, 1
      %p276 = scmp.eq.s32.totalorder %s25, 1
      %p277 = scmp.ne.s32.totalorder %s272, %s274
      %p278 = scmp.eq.s32.totalorder %s25, 0
      %p279 = por %p277, %p278
      %p280 = scmp.ne.s32.totalorder %s272, %s274
      %p281 = scmp.eq.s32.totalorder %s30, 1
      %p282 = por %p280, %p281
      %p283 = scmp.ne.s32.totalorder %s274, %s275
      %p284 = scmp.eq.s32.totalorder %s30, 0
      %p285 = por %p283, %p284
      %p286 = scmp.ne.s32.totalorder %s274, %s275
      %p287 = scmp.eq.s32.totalorder %s31, 1
      %p288 = por %p286, %p287
      %p290 = scmp.ne.s32.totalorder %s275, %s289
      %p291 = scmp.eq.s32.totalorder %s31, 0
      %p292 = por %p290, %p291
      %s293 = ssub.s32 %s32, %s44
      %s294 = ssub.s32 %s33, %s40
      %s295 = sor.u32 %s293, %s294
      %p296 = scmp.eq.s32.totalorder %s295, 0
      %s298 = sadd.s32 %s297, 1
      %s299 = scalar_select %p296, %s297, %s298
      %p302 = pneg %p296
      %p303 = scmp.eq.s32.totalorder %s25, 1
      %p304 = por %p302, %p303
      %p305 = scmp.ne.s32.totalorder %s297, %s300
      %p306 = scmp.eq.s32.totalorder %s25, 0
      %p307 = por %p305, %p306
      %p308 = scmp.ne.s32.totalorder %s297, %s300
      %p309 = scmp.eq.s32.totalorder %s30, 1
      %p310 = por %p308, %p309
      %p311 = scmp.ne.s32.totalorder %s300, %s301
      %p312 = scmp.eq.s32.totalorder %s30, 0
      %p313 = por %p311, %p312
      %p314 = scmp.ne.s32.totalorder %s300, %s301
      %p315 = scmp.eq.s32.totalorder %s31, 1
      %p316 = por %p314, %p315
      %p318 = scmp.ne.s32.totalorder %s301, %s317
      %p319 = scmp.eq.s32.totalorder %s31, 0
      %p320 = por %p318, %p319
      %s321 = ssub.s32 %s32, %s44
      %s322 = ssub.s32 %s33, %s40
      %s323 = sor.u32 %s321, %s322
      %p324 = scmp.eq.s32.totalorder %s323, 0
      %s326 = sadd.s32 %s325, 1
      %s327 = scalar_select %p324, %s325, %s326
      %p330 = pneg %p324
      %p331 = scmp.eq.s32.totalorder %s25, 1
      %p332 = por %p330, %p331
      %p333 = scmp.ne.s32.totalorder %s325, %s328
      %p334 = scmp.eq.s32.totalorder %s25, 0
      %p335 = por %p333, %p334
      %p336 = scmp.ne.s32.totalorder %s325, %s328
      %p337 = scmp.eq.s32.totalorder %s30, 1
      %p338 = por %p336, %p337
      %p339 = scmp.ne.s32.totalorder %s328, %s329
      %p340 = scmp.eq.s32.totalorder %s30, 0
      %p341 = por %p339, %p340
      %p342 = scmp.ne.s32.totalorder %s328, %s329
      %p343 = scmp.eq.s32.totalorder %s31, 1
      %p344 = por %p342, %p343
      %p346 = scmp.ne.s32.totalorder %s329, %s345
      %p347 = scmp.eq.s32.totalorder %s31, 0
      %p348 = por %p346, %p347
      %p349 = scmp.le.s32.totalorder 1, %s25
      %p350 = scmp.lt.s32.totalorder %s25, 3
      %p351 = pnand %p349, %p350
      %p352 = pneg %p351
      // Predicated region
      $region9: #{tpu_custom_call.1} parent=5 // pred_check
        _
      $region10: #{tpu_custom_call.1} parent=5 // pred_check_branch
        %354 = sbr.rel (%p351) target = $region12
      $region11: #{tpu_custom_call.1} parent=5 // pred_region
        %s355 = ssub.s32 %s25, 1
        // Predicated region
        $region13: #{tpu_custom_call.1} parent=11 // pred_check
          %p356 = pneg %p138
        $region14: #{tpu_custom_call.1} parent=11 // pred_check_branch
          %358 = sbr.rel (%p356) target = $region16
        $region15: #{tpu_custom_call.1} parent=11 // pred_region
          _
        $region16: #{tpu_custom_call.1} parent=11 // pred_fallthru
          _
        // Predicated region
        $region17: #{tpu_custom_call.1} parent=11 // pred_check
          %p359 = pneg %p159
        $region18: #{tpu_custom_call.1} parent=11 // pred_check_branch
          %361 = sbr.rel (%p359) target = $region20
        $region19: #{tpu_custom_call.1} parent=11 // pred_region
          _
        $region20: #{tpu_custom_call.1} parent=11 // pred_fallthru
          _
        // Predicated region
        $region21: #{tpu_custom_call.1} parent=11 // pred_check
          %p362 = pneg %p180
        $region22: #{tpu_custom_call.1} parent=11 // pred_check_branch
          %364 = sbr.rel (%p362) target = $region24
        $region23: #{tpu_custom_call.1} parent=11 // pred_region
          _
        $region24: #{tpu_custom_call.1} parent=11 // pred_fallthru
          _
        // Predicated region
        $region25: #{tpu_custom_call.1} parent=11 // pred_check
          %p365 = pneg %p201
        $region26: #{tpu_custom_call.1} parent=11 // pred_check_branch
          %367 = sbr.rel (%p365) target = $region28
        $region27: #{tpu_custom_call.1} parent=11 // pred_region
          _
        $region28: #{tpu_custom_call.1} parent=11 // pred_fallthru
          _
        // Predicated region
        $region29: #{tpu_custom_call.1} parent=11 // pred_check
          %p368 = pneg %p222
        $region30: #{tpu_custom_call.1} parent=11 // pred_check_branch
          %370 = sbr.rel (%p368) target = $region32
        $region31: #{tpu_custom_call.1} parent=11 // pred_region
          _
        $region32: #{tpu_custom_call.1} parent=11 // pred_fallthru
          _
        // Predicated region
        $region33: #{tpu_custom_call.1} parent=11 // pred_check
          %p371 = pneg %p243
        $region34: #{tpu_custom_call.1} parent=11 // pred_check_branch
          %373 = sbr.rel (%p371) target = $region36
        $region35: #{tpu_custom_call.1} parent=11 // pred_region
          _
        $region36: #{tpu_custom_call.1} parent=11 // pred_fallthru
          _
        // Predicated region
        $region37: #{tpu_custom_call.1} parent=11 // pred_check
          %p374 = pneg %p264
        $region38: #{tpu_custom_call.1} parent=11 // pred_check_branch
          %376 = sbr.rel (%p374) target = $region40
        $region39: #{tpu_custom_call.1} parent=11 // pred_region
          _
        $region40: #{tpu_custom_call.1} parent=11 // pred_fallthru
          _
        // Predicated region
        $region41: #{tpu_custom_call.1} parent=11 // pred_check
          %p377 = pneg %p285
        $region42: #{tpu_custom_call.1} parent=11 // pred_check_branch
          %379 = sbr.rel (%p377) target = $region44
        $region43: #{tpu_custom_call.1} parent=11 // pred_region
          _
        $region44: #{tpu_custom_call.1} parent=11 // pred_fallthru
          _
      $region12: #{tpu_custom_call.1} parent=5 // pred_fallthru
        _
      %p380 = scmp.lt.s32.totalorder %s25, 2
      // Predicated region
      $region45: #{tpu_custom_call.1} parent=5 // pred_check
        %p381 = pneg %p380
      $region46: #{tpu_custom_call.1} parent=5 // pred_check_branch
        %383 = sbr.rel (%p381) target = $region48
      $region47: #{tpu_custom_call.1} parent=5 // pred_region
        // Predicated region
        $region49: #{tpu_custom_call.1} parent=47 // pred_check
          %p384 = pneg %p59
        $region50: #{tpu_custom_call.1} parent=47 // pred_check_branch
          %386 = sbr.rel (%p384) target = $region52
        $region51: #{tpu_custom_call.1} parent=47 // pred_region
          %p387 = scmp.lt.s32.totalorder %s32, 1
          %s388 = scalar_select %p387, %s32, 1
          %p389 = scmp.lt.s32.totalorder %s33, 0
          %s390 = scalar_select %p389, %s33, 0
          %s391 = sadd.s32 %s390, %s388
          %s392 = smul.addr %s391, 8
          %s393 = scalar_lea.vmem %s0, %s392
        $region52: #{tpu_custom_call.1} parent=47 // pred_fallthru
          _
        // Predicated region
        $region53: #{tpu_custom_call.1} parent=47 // pred_check
          %p394 = pneg %p85
        $region54: #{tpu_custom_call.1} parent=47 // pred_check_branch
          %396 = sbr.rel (%p394) target = $region56
        $region55: #{tpu_custom_call.1} parent=47 // pred_region
          %p397 = scmp.lt.s32.totalorder %s32, 1
          %s398 = scalar_select %p397, %s32, 1
          %s399 = smul.addr %s398, 8
          %s400 = smul.addr %s399, 8
          %s401 = scalar_lea.vmem %s1, %s400
        $region56: #{tpu_custom_call.1} parent=47 // pred_fallthru
          _
        // Predicated region
        $region57: #{tpu_custom_call.1} parent=47 // pred_check
          %p402 = pneg %p111
        $region58: #{tpu_custom_call.1} parent=47 // pred_check_branch
          %404 = sbr.rel (%p402) target = $region60
        $region59: #{tpu_custom_call.1} parent=47 // pred_region
          %p405 = scmp.lt.s32.totalorder %s32, 1
          %s406 = scalar_select %p405, %s32, 1
          %s407 = smul.addr %s406, 8
          %s408 = smul.addr %s407, 8
          %s409 = scalar_lea.vmem %s2, %s408
        $region60: #{tpu_custom_call.1} parent=47 // pred_fallthru
          _
      $region48: #{tpu_custom_call.1} parent=5 // pred_fallthru
        _
      %p410 = scmp.le.s32.totalorder 1, %s25
      %p411 = scmp.lt.s32.totalorder %s25, 3
      %p412 = pnand %p410, %p411
      %p413 = pneg %p412
      // Predicated region
      $region61: #{tpu_custom_call.1} parent=5 // pred_check
        _
      $region62: #{tpu_custom_call.1} parent=5 // pred_check_branch
        %415 = sbr.rel (%p412) target = $region64
      $region63: #{tpu_custom_call.1} parent=5 // pred_region
        %s416 = ssub.s32 %s25, 1
        %p417 = scmp.lt.s32.totalorder %s34, 1
        %s418 = scalar_select %p417, %s34, 1
        %p419 = scmp.lt.s32.totalorder %s35, 0
        %s420 = scalar_select %p419, %s35, 0
        %s421 = sadd.s32 %s420, %s418
        %s422 = smul.addr %s421, 8
        %s423 = scalar_lea.vmem %s0, %s422
        %p424 = pneg %p65
        %p425 = pneg %p62
        %p426 = scmp.lt.s32.totalorder %s34, 1
        %s427 = scalar_select %p426, %s34, 1
        %s428 = smul.addr %s427, 8
        %s429 = smul.addr %s428, 8
        %s430 = scalar_lea.vmem %s1, %s429
        %p431 = pneg %p91
        %p432 = pneg %p88
        %p433 = scmp.lt.s32.totalorder %s34, 1
        %s434 = scalar_select %p433, %s34, 1
        %s435 = smul.addr %s434, 8
        %s436 = smul.addr %s435, 8
        %s437 = scalar_lea.vmem %s2, %s436
        %p438 = pneg %p117
        %p439 = pneg %p114
        %p440 = pneg %p138
        %p441 = pneg %p135
        %p442 = pneg %p159
        %p443 = pneg %p156
        %p444 = pneg %p180
        %p445 = pneg %p177
        %p446 = pneg %p201
        %p447 = pneg %p198
        %p448 = pneg %p222
        %p449 = pneg %p219
        %p450 = pneg %p243
        %p451 = pneg %p240
        %p452 = pneg %p264
        %p453 = pneg %p261
        %p454 = pneg %p285
        %p455 = pneg %p282
        %p456 = pneg %p313
        %p457 = pneg %p310
        %s458 = sand.u32 %s300, 1
        %s459 = scalar_lea.sflag [#allocation7], %s458
        %s460 = sand.u32 %s300, 1
        %s461 = smul.addr %s460, 8
        %s462 = scalar_lea.vmem [#allocation6], %s461
        %p463 = pneg %p341
        %p464 = pneg %p338
        %s465 = sand.u32 %s328, 1
        %s466 = scalar_lea.sflag [#allocation9], %s465
        %s467 = sand.u32 %s328, 1
        %s468 = smul.addr %s467, 16
        %s469 = scalar_lea.vmem [#allocation8], %s468
        %p470 = scmp.lt.s32.totalorder %s34, 1
        %s471 = scalar_select %p470, %s34, 1
        %p472 = scmp.lt.s32.totalorder %s35, 0
        %s473 = scalar_select %p472, %s35, 0
        %s474 = sadd.s32 %s473, %s471
        %s475 = smul.addr %s474, 8
        %s476 = scalar_lea.vmem %s0, %s475
        %p477 = scmp.lt.s32.totalorder %s34, 1
        %s478 = scalar_select %p477, %s34, 1
        %s479 = smul.addr %s478, 8
        %s480 = smul.addr %s479, 8
        %s481 = scalar_lea.vmem %s1, %s480
        %p482 = scmp.lt.s32.totalorder %s34, 1
        %s483 = scalar_select %p482, %s34, 1
        %s484 = smul.addr %s483, 8
        %s485 = smul.addr %s484, 8
        %s486 = scalar_lea.vmem %s2, %s485
        %p488 = scmp.eq.s32.totalorder %s35, 0
        // Predicated region
        $region65: #{tpu_custom_call.1} parent=63 // pred_check
          %p489 = pneg %p488
        $region66: #{tpu_custom_call.1} parent=63 // pred_check_branch
          %491 = sbr.rel (%p489) target = $region68
        $region67: #{tpu_custom_call.1} parent=63 // pred_region
          %v492 = vld [vmem:[%s481] sm:$0xff]
          %v493 = vld [vmem:[%s481 + $0x8] sm:$0xff]
          %v494 = vld [vmem:[%s481 + $0x10] sm:$0xff]
          %v495 = vld [vmem:[%s481 + $0x18] sm:$0xff]
          %v496 = vld [vmem:[%s481 + $0x20] sm:$0xff]
          %v497 = vld [vmem:[%s481 + $0x28] sm:$0xff]
          %v498 = vld [vmem:[%s481 + $0x30] sm:$0xff]
          %v499 = vld [vmem:[%s481 + $0x38] sm:$0xff]
          %v500 = vpack.c.bf16 %v492, %v492
          %v501 = vpack.c.bf16 %v493, %v493
          %v502 = vpack.c.bf16 %v494, %v494
          %v503 = vpack.c.bf16 %v495, %v495
          %v504 = vpack.c.bf16 %v496, %v496
          %v505 = vpack.c.bf16 %v497, %v497
          %v506 = vpack.c.bf16 %v498, %v498
          %v507 = vpack.c.bf16 %v499, %v499
          %v508 = vld [vmem:[%s486] sm:$0xff]
          %v509 = vld [vmem:[%s486 + $0x8] sm:$0xff]
          %v510 = vld [vmem:[%s486 + $0x10] sm:$0xff]
          %v511 = vld [vmem:[%s486 + $0x18] sm:$0xff]
          %v512 = vld [vmem:[%s486 + $0x20] sm:$0xff]
          %v513 = vld [vmem:[%s486 + $0x28] sm:$0xff]
          %v514 = vld [vmem:[%s486 + $0x30] sm:$0xff]
          %v515 = vld [vmem:[%s486 + $0x38] sm:$0xff]
          %v516 = vpack.c.bf16 %v508, %v508
          %v517 = vpack.c.bf16 %v509, %v509
          %v518 = vpack.c.bf16 %v510, %v510
          %v519 = vpack.c.bf16 %v511, %v511
          %v520 = vpack.c.bf16 %v512, %v512
          %v521 = vpack.c.bf16 %v513, %v513
          %v522 = vpack.c.bf16 %v514, %v514
          %v523 = vpack.c.bf16 %v515, %v515
          %v524 = vld [vmem:[%s5] sm:$0xf]
          %v525 = vld [vmem:[%s5 + $0x4] sm:$0xf]
          %v526 = vld [vmem:[%s5 + $0x8] sm:$0xf]
          %v527 = vld [vmem:[%s5 + $0xc] sm:$0xf]
          %v528 = vld [vmem:[%s5 + $0x10] sm:$0xf]
          %v529 = vld [vmem:[%s5 + $0x14] sm:$0xf]
          %v530 = vld [vmem:[%s5 + $0x18] sm:$0xf]
          %v531 = vld [vmem:[%s5 + $0x1c] sm:$0xf]
          %v532 = vld [vmem:[%s5 + $0x20] sm:$0xf]
          %v533 = vld [vmem:[%s5 + $0x24] sm:$0xf]
          %v534 = vld [vmem:[%s5 + $0x28] sm:$0xf]
          %v535 = vld [vmem:[%s5 + $0x2c] sm:$0xf]
          %v536 = vld [vmem:[%s5 + $0x30] sm:$0xf]
          %v537 = vld [vmem:[%s5 + $0x34] sm:$0xf]
          %v538 = vld [vmem:[%s5 + $0x38] sm:$0xf]
          %v539 = vld [vmem:[%s5 + $0x3c] sm:$0xf]
          %v540 = vld [vmem:[%s5 + $0x40] sm:$0xf]
          %v541 = vld [vmem:[%s5 + $0x44] sm:$0xf]
          %v542 = vld [vmem:[%s5 + $0x48] sm:$0xf]
          %v543 = vld [vmem:[%s5 + $0x4c] sm:$0xf]
          %v544 = vld [vmem:[%s5 + $0x50] sm:$0xf]
          %v545 = vld [vmem:[%s5 + $0x54] sm:$0xf]
          %v546 = vld [vmem:[%s5 + $0x58] sm:$0xf]
          %v547 = vld [vmem:[%s5 + $0x5c] sm:$0xf]
          %v548 = vld [vmem:[%s5 + $0x60] sm:$0xf]
          %v549 = vld [vmem:[%s5 + $0x64] sm:$0xf]
          %v550 = vld [vmem:[%s5 + $0x68] sm:$0xf]
          %v551 = vld [vmem:[%s5 + $0x6c] sm:$0xf]
          %v552 = vld [vmem:[%s5 + $0x70] sm:$0xf]
          %v553 = vld [vmem:[%s5 + $0x74] sm:$0xf]
          %v554 = vld [vmem:[%s5 + $0x78] sm:$0xf]
          %v555 = vld [vmem:[%s5 + $0x7c] sm:$0xf]
          %v556 = vld [vmem:[%s5 + $0x80] sm:$0xf]
          %v557 = vld [vmem:[%s5 + $0x84] sm:$0xf]
          %v558 = vld [vmem:[%s5 + $0x88] sm:$0xf]
          %v559 = vld [vmem:[%s5 + $0x8c] sm:$0xf]
          %v560 = vld [vmem:[%s5 + $0x90] sm:$0xf]
          %v561 = vld [vmem:[%s5 + $0x94] sm:$0xf]
          %v562 = vld [vmem:[%s5 + $0x98] sm:$0xf]
          %v563 = vld [vmem:[%s5 + $0x9c] sm:$0xf]
          %v564 = vld [vmem:[%s5 + $0xa0] sm:$0xf]
          %v565 = vld [vmem:[%s5 + $0xa4] sm:$0xf]
          %v566 = vld [vmem:[%s5 + $0xa8] sm:$0xf]
          %v567 = vld [vmem:[%s5 + $0xac] sm:$0xf]
          %v568 = vld [vmem:[%s5 + $0xb0] sm:$0xf]
          %v569 = vld [vmem:[%s5 + $0xb4] sm:$0xf]
          %v570 = vld [vmem:[%s5 + $0xb8] sm:$0xf]
          %v571 = vld [vmem:[%s5 + $0xbc] sm:$0xf]
          %v572 = vld [vmem:[%s5 + $0xc0] sm:$0xf]
          %v573 = vld [vmem:[%s5 + $0xc4] sm:$0xf]
          %v574 = vld [vmem:[%s5 + $0xc8] sm:$0xf]
          %v575 = vld [vmem:[%s5 + $0xcc] sm:$0xf]
          %v576 = vld [vmem:[%s5 + $0xd0] sm:$0xf]
          %v577 = vld [vmem:[%s5 + $0xd4] sm:$0xf]
          %v578 = vld [vmem:[%s5 + $0xd8] sm:$0xf]
          %v579 = vld [vmem:[%s5 + $0xdc] sm:$0xf]
          %v580 = vld [vmem:[%s5 + $0xe0] sm:$0xf]
          %v581 = vld [vmem:[%s5 + $0xe4] sm:$0xf]
          %v582 = vld [vmem:[%s5 + $0xe8] sm:$0xf]
          %v583 = vld [vmem:[%s5 + $0xec] sm:$0xf]
          %v584 = vld [vmem:[%s5 + $0xf0] sm:$0xf]
          %v585 = vld [vmem:[%s5 + $0xf4] sm:$0xf]
          %v586 = vld [vmem:[%s5 + $0xf8] sm:$0xf]
          %v587 = vld [vmem:[%s5 + $0xfc] sm:$0xf]
          %v588 = vld [vmem:[%s5 + $0x100] sm:$0xf]
          %v589 = vld [vmem:[%s5 + $0x104] sm:$0xf]
          %v590 = vld [vmem:[%s5 + $0x108] sm:$0xf]
          %v591 = vld [vmem:[%s5 + $0x10c] sm:$0xf]
          %v592 = vld [vmem:[%s5 + $0x110] sm:$0xf]
          %v593 = vld [vmem:[%s5 + $0x114] sm:$0xf]
          %v594 = vld [vmem:[%s5 + $0x118] sm:$0xf]
          %v595 = vld [vmem:[%s5 + $0x11c] sm:$0xf]
          %v596 = vld [vmem:[%s5 + $0x120] sm:$0xf]
          %v597 = vld [vmem:[%s5 + $0x124] sm:$0xf]
          %v598 = vld [vmem:[%s5 + $0x128] sm:$0xf]
          %v599 = vld [vmem:[%s5 + $0x12c] sm:$0xf]
          %v600 = vld [vmem:[%s5 + $0x130] sm:$0xf]
          %v601 = vld [vmem:[%s5 + $0x134] sm:$0xf]
          %v602 = vld [vmem:[%s5 + $0x138] sm:$0xf]
          %v603 = vld [vmem:[%s5 + $0x13c] sm:$0xf]
          %v604 = vld [vmem:[%s5 + $0x140] sm:$0xf]
          %v605 = vld [vmem:[%s5 + $0x144] sm:$0xf]
          %v606 = vld [vmem:[%s5 + $0x148] sm:$0xf]
          %v607 = vld [vmem:[%s5 + $0x14c] sm:$0xf]
          %v608 = vld [vmem:[%s5 + $0x150] sm:$0xf]
          %v609 = vld [vmem:[%s5 + $0x154] sm:$0xf]
          %v610 = vld [vmem:[%s5 + $0x158] sm:$0xf]
          %v611 = vld [vmem:[%s5 + $0x15c] sm:$0xf]
          %v612 = vld [vmem:[%s5 + $0x160] sm:$0xf]
          %v613 = vld [vmem:[%s5 + $0x164] sm:$0xf]
          %v614 = vld [vmem:[%s5 + $0x168] sm:$0xf]
          %v615 = vld [vmem:[%s5 + $0x16c] sm:$0xf]
          %v616 = vld [vmem:[%s5 + $0x170] sm:$0xf]
          %v617 = vld [vmem:[%s5 + $0x174] sm:$0xf]
          %v618 = vld [vmem:[%s5 + $0x178] sm:$0xf]
          %v619 = vld [vmem:[%s5 + $0x17c] sm:$0xf]
          %v620 = vld [vmem:[%s5 + $0x180] sm:$0xf]
          %v621 = vld [vmem:[%s5 + $0x184] sm:$0xf]
          %v622 = vld [vmem:[%s5 + $0x188] sm:$0xf]
          %v623 = vld [vmem:[%s5 + $0x18c] sm:$0xf]
          %v624 = vld [vmem:[%s5 + $0x190] sm:$0xf]
          %v625 = vld [vmem:[%s5 + $0x194] sm:$0xf]
          %v626 = vld [vmem:[%s5 + $0x198] sm:$0xf]
          %v627 = vld [vmem:[%s5 + $0x19c] sm:$0xf]
          %v628 = vld [vmem:[%s5 + $0x1a0] sm:$0xf]
          %v629 = vld [vmem:[%s5 + $0x1a4] sm:$0xf]
          %v630 = vld [vmem:[%s5 + $0x1a8] sm:$0xf]
          %v631 = vld [vmem:[%s5 + $0x1ac] sm:$0xf]
          %v632 = vld [vmem:[%s5 + $0x1b0] sm:$0xf]
          %v633 = vld [vmem:[%s5 + $0x1b4] sm:$0xf]
          %v634 = vld [vmem:[%s5 + $0x1b8] sm:$0xf]
          %v635 = vld [vmem:[%s5 + $0x1bc] sm:$0xf]
          %v636 = vld [vmem:[%s5 + $0x1c0] sm:$0xf]
          %v637 = vld [vmem:[%s5 + $0x1c4] sm:$0xf]
          %v638 = vld [vmem:[%s5 + $0x1c8] sm:$0xf]
          %v639 = vld [vmem:[%s5 + $0x1cc] sm:$0xf]
          %v640 = vld [vmem:[%s5 + $0x1d0] sm:$0xf]
          %v641 = vld [vmem:[%s5 + $0x1d4] sm:$0xf]
          %v642 = vld [vmem:[%s5 + $0x1d8] sm:$0xf]
          %v643 = vld [vmem:[%s5 + $0x1dc] sm:$0xf]
          %v644 = vld [vmem:[%s5 + $0x1e0] sm:$0xf]
          %v645 = vld [vmem:[%s5 + $0x1e4] sm:$0xf]
          %v646 = vld [vmem:[%s5 + $0x1e8] sm:$0xf]
          %v647 = vld [vmem:[%s5 + $0x1ec] sm:$0xf]
          %v648 = vld [vmem:[%s5 + $0x1f0] sm:$0xf]
          %v649 = vld [vmem:[%s5 + $0x1f4] sm:$0xf]
          %v650 = vld [vmem:[%s5 + $0x1f8] sm:$0xf]
          %v651 = vld [vmem:[%s5 + $0x1fc] sm:$0xf]
          %v652 = vld [vmem:[%s6] sm:$0x1]
          %v654 = vperm.slane %v652, 0
          %v784 = vunpack.c.l.b16 %v524
          %v785 = vunpack.c.l.b16 %v525
          %v786 = vunpack.c.l.b16 %v526
          %v787 = vunpack.c.l.b16 %v527
          %v788 = vunpack.c.l.b16 %v528
          %v789 = vunpack.c.l.b16 %v529
          %v790 = vunpack.c.l.b16 %v530
          %v791 = vunpack.c.l.b16 %v531
          %v792 = vunpack.c.l.b16 %v532
          %v793 = vunpack.c.l.b16 %v533
          %v794 = vunpack.c.l.b16 %v534
          %v795 = vunpack.c.l.b16 %v535
          %v796 = vunpack.c.l.b16 %v536
          %v797 = vunpack.c.l.b16 %v537
          %v798 = vunpack.c.l.b16 %v538
          %v799 = vunpack.c.l.b16 %v539
          %v800 = vunpack.c.l.b16 %v540
          %v801 = vunpack.c.l.b16 %v541
          %v802 = vunpack.c.l.b16 %v542
          %v803 = vunpack.c.l.b16 %v543
          %v804 = vunpack.c.l.b16 %v544
          %v805 = vunpack.c.l.b16 %v545
          %v806 = vunpack.c.l.b16 %v546
          %v807 = vunpack.c.l.b16 %v547
          %v808 = vunpack.c.l.b16 %v548
          %v809 = vunpack.c.l.b16 %v549
          %v810 = vunpack.c.l.b16 %v550
          %v811 = vunpack.c.l.b16 %v551
          %v812 = vunpack.c.l.b16 %v552
          %v813 = vunpack.c.l.b16 %v553
          %v814 = vunpack.c.l.b16 %v554
          %v815 = vunpack.c.l.b16 %v555
          %v816 = vunpack.c.l.b16 %v556
          %v817 = vunpack.c.l.b16 %v557
          %v818 = vunpack.c.l.b16 %v558
          %v819 = vunpack.c.l.b16 %v559
          %v820 = vunpack.c.l.b16 %v560
          %v821 = vunpack.c.l.b16 %v561
          %v822 = vunpack.c.l.b16 %v562
          %v823 = vunpack.c.l.b16 %v563
          %v824 = vunpack.c.l.b16 %v564
          %v825 = vunpack.c.l.b16 %v565
          %v826 = vunpack.c.l.b16 %v566
          %v827 = vunpack.c.l.b16 %v567
          %v828 = vunpack.c.l.b16 %v568
          %v829 = vunpack.c.l.b16 %v569
          %v830 = vunpack.c.l.b16 %v570
          %v831 = vunpack.c.l.b16 %v571
          %v832 = vunpack.c.l.b16 %v572
          %v833 = vunpack.c.l.b16 %v573
          %v834 = vunpack.c.l.b16 %v574
          %v835 = vunpack.c.l.b16 %v575
          %v836 = vunpack.c.l.b16 %v576
          %v837 = vunpack.c.l.b16 %v577
          %v838 = vunpack.c.l.b16 %v578
          %v839 = vunpack.c.l.b16 %v579
          %v840 = vunpack.c.l.b16 %v580
          %v841 = vunpack.c.l.b16 %v581
          %v842 = vunpack.c.l.b16 %v582
          %v843 = vunpack.c.l.b16 %v583
          %v844 = vunpack.c.l.b16 %v584
          %v845 = vunpack.c.l.b16 %v585
          %v846 = vunpack.c.l.b16 %v586
          %v847 = vunpack.c.l.b16 %v587
          %v848 = vunpack.c.l.b16 %v588
          %v849 = vunpack.c.l.b16 %v589
          %v850 = vunpack.c.l.b16 %v590
          %v851 = vunpack.c.l.b16 %v591
          %v852 = vunpack.c.l.b16 %v592
          %v853 = vunpack.c.l.b16 %v593
          %v854 = vunpack.c.l.b16 %v594
          %v855 = vunpack.c.l.b16 %v595
          %v856 = vunpack.c.l.b16 %v596
          %v857 = vunpack.c.l.b16 %v597
          %v858 = vunpack.c.l.b16 %v598
          %v859 = vunpack.c.l.b16 %v599
          %v860 = vunpack.c.l.b16 %v600
          %v861 = vunpack.c.l.b16 %v601
          %v862 = vunpack.c.l.b16 %v602
          %v863 = vunpack.c.l.b16 %v603
          %v864 = vunpack.c.l.b16 %v604
          %v865 = vunpack.c.l.b16 %v605
          %v866 = vunpack.c.l.b16 %v606
          %v867 = vunpack.c.l.b16 %v607
          %v868 = vunpack.c.l.b16 %v608
          %v869 = vunpack.c.l.b16 %v609
          %v870 = vunpack.c.l.b16 %v610
          %v871 = vunpack.c.l.b16 %v611
          %v872 = vunpack.c.l.b16 %v612
          %v873 = vunpack.c.l.b16 %v613
          %v874 = vunpack.c.l.b16 %v614
          %v875 = vunpack.c.l.b16 %v615
          %v876 = vunpack.c.l.b16 %v616
          %v877 = vunpack.c.l.b16 %v617
          %v878 = vunpack.c.l.b16 %v618
          %v879 = vunpack.c.l.b16 %v619
          %v880 = vunpack.c.l.b16 %v620
          %v881 = vunpack.c.l.b16 %v621
          %v882 = vunpack.c.l.b16 %v622
          %v883 = vunpack.c.l.b16 %v623
          %v884 = vunpack.c.l.b16 %v624
          %v885 = vunpack.c.l.b16 %v625
          %v886 = vunpack.c.l.b16 %v626
          %v887 = vunpack.c.l.b16 %v627
          %v888 = vunpack.c.l.b16 %v628
          %v889 = vunpack.c.l.b16 %v629
          %v890 = vunpack.c.l.b16 %v630
          %v891 = vunpack.c.l.b16 %v631
          %v892 = vunpack.c.l.b16 %v632
          %v893 = vunpack.c.l.b16 %v633
          %v894 = vunpack.c.l.b16 %v634
          %v895 = vunpack.c.l.b16 %v635
          %v896 = vunpack.c.l.b16 %v636
          %v897 = vunpack.c.l.b16 %v637
          %v898 = vunpack.c.l.b16 %v638
          %v899 = vunpack.c.l.b16 %v639
          %v900 = vunpack.c.l.b16 %v640
          %v901 = vunpack.c.l.b16 %v641
          %v902 = vunpack.c.l.b16 %v642
          %v903 = vunpack.c.l.b16 %v643
          %v904 = vunpack.c.l.b16 %v644
          %v905 = vunpack.c.l.b16 %v645
          %v906 = vunpack.c.l.b16 %v646
          %v907 = vunpack.c.l.b16 %v647
          %v908 = vunpack.c.l.b16 %v648
          %v909 = vunpack.c.l.b16 %v649
          %v910 = vunpack.c.l.b16 %v650
          %v911 = vunpack.c.l.b16 %v651
          %v912 = vpack.c.b16 %v785, %v784
          %v913 = vpack.c.b16 %v787, %v786
          %v914 = vpack.c.b16 %v789, %v788
          %v915 = vpack.c.b16 %v791, %v790
          %v916 = vpack.c.b16 %v793, %v792
          %v917 = vpack.c.b16 %v795, %v794
          %v918 = vpack.c.b16 %v797, %v796
          %v919 = vpack.c.b16 %v799, %v798
          %v920 = vpack.c.b16 %v801, %v800
          %v921 = vpack.c.b16 %v803, %v802
          %v922 = vpack.c.b16 %v805, %v804
          %v923 = vpack.c.b16 %v807, %v806
          %v924 = vpack.c.b16 %v809, %v808
          %v925 = vpack.c.b16 %v811, %v810
          %v926 = vpack.c.b16 %v813, %v812
          %v927 = vpack.c.b16 %v815, %v814
          %v928 = vpack.c.b16 %v817, %v816
          %v929 = vpack.c.b16 %v819, %v818
          %v930 = vpack.c.b16 %v821, %v820
          %v931 = vpack.c.b16 %v823, %v822
          %v932 = vpack.c.b16 %v825, %v824
          %v933 = vpack.c.b16 %v827, %v826
          %v934 = vpack.c.b16 %v829, %v828
          %v935 = vpack.c.b16 %v831, %v830
          %v936 = vpack.c.b16 %v833, %v832
          %v937 = vpack.c.b16 %v835, %v834
          %v938 = vpack.c.b16 %v837, %v836
          %v939 = vpack.c.b16 %v839, %v838
          %v940 = vpack.c.b16 %v841, %v840
          %v941 = vpack.c.b16 %v843, %v842
          %v942 = vpack.c.b16 %v845, %v844
          %v943 = vpack.c.b16 %v847, %v846
          %v944 = vpack.c.b16 %v849, %v848
          %v945 = vpack.c.b16 %v851, %v850
          %v946 = vpack.c.b16 %v853, %v852
          %v947 = vpack.c.b16 %v855, %v854
          %v948 = vpack.c.b16 %v857, %v856
          %v949 = vpack.c.b16 %v859, %v858
          %v950 = vpack.c.b16 %v861, %v860
          %v951 = vpack.c.b16 %v863, %v862
          %v952 = vpack.c.b16 %v865, %v864
          %v953 = vpack.c.b16 %v867, %v866
          %v954 = vpack.c.b16 %v869, %v868
          %v955 = vpack.c.b16 %v871, %v870
          %v956 = vpack.c.b16 %v873, %v872
          %v957 = vpack.c.b16 %v875, %v874
          %v958 = vpack.c.b16 %v877, %v876
          %v959 = vpack.c.b16 %v879, %v878
          %v960 = vpack.c.b16 %v881, %v880
          %v961 = vpack.c.b16 %v883, %v882
          %v962 = vpack.c.b16 %v885, %v884
          %v963 = vpack.c.b16 %v887, %v886
          %v964 = vpack.c.b16 %v889, %v888
          %v965 = vpack.c.b16 %v891, %v890
          %v966 = vpack.c.b16 %v893, %v892
          %v967 = vpack.c.b16 %v895, %v894
          %v968 = vpack.c.b16 %v897, %v896
          %v969 = vpack.c.b16 %v899, %v898
          %v970 = vpack.c.b16 %v901, %v900
          %v971 = vpack.c.b16 %v903, %v902
          %v972 = vpack.c.b16 %v905, %v904
          %v973 = vpack.c.b16 %v907, %v906
          %v974 = vpack.c.b16 %v909, %v908
          %v975 = vpack.c.b16 %v911, %v910
          %1040 = vmatpush.bf16.msra.mxu0 %v919
          %1041 = vmatpush.bf16.msra.mxu0 %v918
          %1042 = vmatpush.bf16.msra.mxu0 %v917
          %1043 = vmatpush.bf16.msra.mxu0 %v916
          %1044 = vmatpush.bf16.msra.mxu0 %v915
          %1045 = vmatpush.bf16.msra.mxu0 %v914
          %1046 = vmatpush.bf16.msra.mxu0 %v913
          %1047 = vmatpush.bf16.msra.mxu0 %v912
          %1048 = vmatmul.bf16.gmra.mxu0 %v500
          %v1049 = vpop.f32.mrf.mxu0
          %v1050 = vadd.f32 %v654, %v1049
          %v1051 = vpop.f32.mrf.mxu0
          %1052 = vdwg.mxu0
          %1053 = vmatpush.bf16.msra.mxu0 %v927
          %1054 = vmatpush.bf16.msra.mxu0 %v926
          %1055 = vmatpush.bf16.msra.mxu0 %v925
          %1056 = vmatpush.bf16.msra.mxu0 %v924
          %1057 = vmatpush.bf16.msra.mxu0 %v923
          %1058 = vmatpush.bf16.msra.mxu0 %v922
          %1059 = vmatpush.bf16.msra.mxu0 %v921
          %1060 = vmatpush.bf16.msra.mxu0 %v920
          %1061 = vmatmul.bf16.gmra.mxu0 %v501
          %v1062 = vpop.f32.mrf.mxu0
          %v1063 = vadd.f32 %v1050, %v1062
          %v1064 = vpop.f32.mrf.mxu0
          %1065 = vdwg.mxu0
          %1066 = vmatpush.bf16.msra.mxu0 %v935
          %1067 = vmatpush.bf16.msra.mxu0 %v934
          %1068 = vmatpush.bf16.msra.mxu0 %v933
          %1069 = vmatpush.bf16.msra.mxu0 %v932
          %1070 = vmatpush.bf16.msra.mxu0 %v931
          %1071 = vmatpush.bf16.msra.mxu0 %v930
          %1072 = vmatpush.bf16.msra.mxu0 %v929
          %1073 = vmatpush.bf16.msra.mxu0 %v928
          %1074 = vmatmul.bf16.gmra.mxu0 %v502
          %v1075 = vpop.f32.mrf.mxu0
          %v1076 = vadd.f32 %v1063, %v1075
          %v1077 = vpop.f32.mrf.mxu0
          %1078 = vdwg.mxu0
          %1079 = vmatpush.bf16.msra.mxu0 %v943
          %1080 = vmatpush.bf16.msra.mxu0 %v942
          %1081 = vmatpush.bf16.msra.mxu0 %v941
          %1082 = vmatpush.bf16.msra.mxu0 %v940
          %1083 = vmatpush.bf16.msra.mxu0 %v939
          %1084 = vmatpush.bf16.msra.mxu0 %v938
          %1085 = vmatpush.bf16.msra.mxu0 %v937
          %1086 = vmatpush.bf16.msra.mxu0 %v936
          %1087 = vmatmul.bf16.gmra.mxu0 %v503
          %v1088 = vpop.f32.mrf.mxu0
          %v1089 = vadd.f32 %v1076, %v1088
          %v1090 = vpop.f32.mrf.mxu0
          %1091 = vdwg.mxu0
          %1092 = vmatpush.bf16.msra.mxu0 %v951
          %1093 = vmatpush.bf16.msra.mxu0 %v950
          %1094 = vmatpush.bf16.msra.mxu0 %v949
          %1095 = vmatpush.bf16.msra.mxu0 %v948
          %1096 = vmatpush.bf16.msra.mxu0 %v947
          %1097 = vmatpush.bf16.msra.mxu0 %v946
          %1098 = vmatpush.bf16.msra.mxu0 %v945
          %1099 = vmatpush.bf16.msra.mxu0 %v944
          %1100 = vmatmul.bf16.gmra.mxu0 %v504
          %v1101 = vpop.f32.mrf.mxu0
          %v1102 = vadd.f32 %v1089, %v1101
          %v1103 = vpop.f32.mrf.mxu0
          %1104 = vdwg.mxu0
          %1105 = vmatpush.bf16.msra.mxu0 %v959
          %1106 = vmatpush.bf16.msra.mxu0 %v958
          %1107 = vmatpush.bf16.msra.mxu0 %v957
          %1108 = vmatpush.bf16.msra.mxu0 %v956
          %1109 = vmatpush.bf16.msra.mxu0 %v955
          %1110 = vmatpush.bf16.msra.mxu0 %v954
          %1111 = vmatpush.bf16.msra.mxu0 %v953
          %1112 = vmatpush.bf16.msra.mxu0 %v952
          %1113 = vmatmul.bf16.gmra.mxu0 %v505
          %v1114 = vpop.f32.mrf.mxu0
          %v1115 = vadd.f32 %v1102, %v1114
          %v1116 = vpop.f32.mrf.mxu0
          %1117 = vdwg.mxu0
          %1118 = vmatpush.bf16.msra.mxu0 %v967
          %1119 = vmatpush.bf16.msra.mxu0 %v966
          %1120 = vmatpush.bf16.msra.mxu0 %v965
          %1121 = vmatpush.bf16.msra.mxu0 %v964
          %1122 = vmatpush.bf16.msra.mxu0 %v963
          %1123 = vmatpush.bf16.msra.mxu0 %v962
          %1124 = vmatpush.bf16.msra.mxu0 %v961
          %1125 = vmatpush.bf16.msra.mxu0 %v960
          %1126 = vmatmul.bf16.gmra.mxu0 %v506
          %v1127 = vpop.f32.mrf.mxu0
          %v1128 = vadd.f32 %v1115, %v1127
          %v1129 = vpop.f32.mrf.mxu0
          %1130 = vdwg.mxu0
          %1131 = vmatpush.bf16.msra.mxu0 %v975
          %1132 = vmatpush.bf16.msra.mxu0 %v974
          %1133 = vmatpush.bf16.msra.mxu0 %v973
          %1134 = vmatpush.bf16.msra.mxu0 %v972
          %1135 = vmatpush.bf16.msra.mxu0 %v971
          %1136 = vmatpush.bf16.msra.mxu0 %v970
          %1137 = vmatpush.bf16.msra.mxu0 %v969
          %1138 = vmatpush.bf16.msra.mxu0 %v968
          %1139 = vmatmul.bf16.gmra.mxu0 %v507
          %v1140 = vpop.f32.mrf.mxu0
          %v1141 = vadd.f32 %v1128, %v1140
          %v1142 = vpop.f32.mrf.mxu0
          %1143 = vdwg.mxu0
          %vm1144 = vcmask 261120
          %1145 = vst.msk [vmem:[#allocation2] sm:$0xff] %vm1144, %v1141
          %v1146 = vld [vmem:[%s7] sm:$0xf]
          %v1147 = vld [vmem:[%s7 + $0x4] sm:$0xf]
          %v1148 = vld [vmem:[%s7 + $0x8] sm:$0xf]
          %v1149 = vld [vmem:[%s7 + $0xc] sm:$0xf]
          %v1150 = vld [vmem:[%s7 + $0x10] sm:$0xf]
          %v1151 = vld [vmem:[%s7 + $0x14] sm:$0xf]
          %v1152 = vld [vmem:[%s7 + $0x18] sm:$0xf]
          %v1153 = vld [vmem:[%s7 + $0x1c] sm:$0xf]
          %v1154 = vld [vmem:[%s7 + $0x20] sm:$0xf]
          %v1155 = vld [vmem:[%s7 + $0x24] sm:$0xf]
          %v1156 = vld [vmem:[%s7 + $0x28] sm:$0xf]
          %v1157 = vld [vmem:[%s7 + $0x2c] sm:$0xf]
          %v1158 = vld [vmem:[%s7 + $0x30] sm:$0xf]
          %v1159 = vld [vmem:[%s7 + $0x34] sm:$0xf]
          %v1160 = vld [vmem:[%s7 + $0x38] sm:$0xf]
          %v1161 = vld [vmem:[%s7 + $0x3c] sm:$0xf]
          %v1162 = vld [vmem:[%s7 + $0x40] sm:$0xf]
          %v1163 = vld [vmem:[%s7 + $0x44] sm:$0xf]
          %v1164 = vld [vmem:[%s7 + $0x48] sm:$0xf]
          %v1165 = vld [vmem:[%s7 + $0x4c] sm:$0xf]
          %v1166 = vld [vmem:[%s7 + $0x50] sm:$0xf]
          %v1167 = vld [vmem:[%s7 + $0x54] sm:$0xf]
          %v1168 = vld [vmem:[%s7 + $0x58] sm:$0xf]
          %v1169 = vld [vmem:[%s7 + $0x5c] sm:$0xf]
          %v1170 = vld [vmem:[%s7 + $0x60] sm:$0xf]
          %v1171 = vld [vmem:[%s7 + $0x64] sm:$0xf]
          %v1172 = vld [vmem:[%s7 + $0x68] sm:$0xf]
          %v1173 = vld [vmem:[%s7 + $0x6c] sm:$0xf]
          %v1174 = vld [vmem:[%s7 + $0x70] sm:$0xf]
          %v1175 = vld [vmem:[%s7 + $0x74] sm:$0xf]
          %v1176 = vld [vmem:[%s7 + $0x78] sm:$0xf]
          %v1177 = vld [vmem:[%s7 + $0x7c] sm:$0xf]
          %v1178 = vld [vmem:[%s7 + $0x80] sm:$0xf]
          %v1179 = vld [vmem:[%s7 + $0x84] sm:$0xf]
          %v1180 = vld [vmem:[%s7 + $0x88] sm:$0xf]
          %v1181 = vld [vmem:[%s7 + $0x8c] sm:$0xf]
          %v1182 = vld [vmem:[%s7 + $0x90] sm:$0xf]
          %v1183 = vld [vmem:[%s7 + $0x94] sm:$0xf]
          %v1184 = vld [vmem:[%s7 + $0x98] sm:$0xf]
          %v1185 = vld [vmem:[%s7 + $0x9c] sm:$0xf]
          %v1186 = vld [vmem:[%s7 + $0xa0] sm:$0xf]
          %v1187 = vld [vmem:[%s7 + $0xa4] sm:$0xf]
          %v1188 = vld [vmem:[%s7 + $0xa8] sm:$0xf]
          %v1189 = vld [vmem:[%s7 + $0xac] sm:$0xf]
          %v1190 = vld [vmem:[%s7 + $0xb0] sm:$0xf]
          %v1191 = vld [vmem:[%s7 + $0xb4] sm:$0xf]
          %v1192 = vld [vmem:[%s7 + $0xb8] sm:$0xf]
          %v1193 = vld [vmem:[%s7 + $0xbc] sm:$0xf]
          %v1194 = vld [vmem:[%s7 + $0xc0] sm:$0xf]
          %v1195 = vld [vmem:[%s7 + $0xc4] sm:$0xf]
          %v1196 = vld [vmem:[%s7 + $0xc8] sm:$0xf]
          %v1197 = vld [vmem:[%s7 + $0xcc] sm:$0xf]
          %v1198 = vld [vmem:[%s7 + $0xd0] sm:$0xf]
          %v1199 = vld [vmem:[%s7 + $0xd4] sm:$0xf]
          %v1200 = vld [vmem:[%s7 + $0xd8] sm:$0xf]
          %v1201 = vld [vmem:[%s7 + $0xdc] sm:$0xf]
          %v1202 = vld [vmem:[%s7 + $0xe0] sm:$0xf]
          %v1203 = vld [vmem:[%s7 + $0xe4] sm:$0xf]
          %v1204 = vld [vmem:[%s7 + $0xe8] sm:$0xf]
          %v1205 = vld [vmem:[%s7 + $0xec] sm:$0xf]
          %v1206 = vld [vmem:[%s7 + $0xf0] sm:$0xf]
          %v1207 = vld [vmem:[%s7 + $0xf4] sm:$0xf]
          %v1208 = vld [vmem:[%s7 + $0xf8] sm:$0xf]
          %v1209 = vld [vmem:[%s7 + $0xfc] sm:$0xf]
          %v1210 = vld [vmem:[%s7 + $0x100] sm:$0xf]
          %v1211 = vld [vmem:[%s7 + $0x104] sm:$0xf]
          %v1212 = vld [vmem:[%s7 + $0x108] sm:$0xf]
          %v1213 = vld [vmem:[%s7 + $0x10c] sm:$0xf]
          %v1214 = vld [vmem:[%s7 + $0x110] sm:$0xf]
          %v1215 = vld [vmem:[%s7 + $0x114] sm:$0xf]
          %v1216 = vld [vmem:[%s7 + $0x118] sm:$0xf]
          %v1217 = vld [vmem:[%s7 + $0x11c] sm:$0xf]
          %v1218 = vld [vmem:[%s7 + $0x120] sm:$0xf]
          %v1219 = vld [vmem:[%s7 + $0x124] sm:$0xf]
          %v1220 = vld [vmem:[%s7 + $0x128] sm:$0xf]
          %v1221 = vld [vmem:[%s7 + $0x12c] sm:$0xf]
          %v1222 = vld [vmem:[%s7 + $0x130] sm:$0xf]
          %v1223 = vld [vmem:[%s7 + $0x134] sm:$0xf]
          %v1224 = vld [vmem:[%s7 + $0x138] sm:$0xf]
          %v1225 = vld [vmem:[%s7 + $0x13c] sm:$0xf]
          %v1226 = vld [vmem:[%s7 + $0x140] sm:$0xf]
          %v1227 = vld [vmem:[%s7 + $0x144] sm:$0xf]
          %v1228 = vld [vmem:[%s7 + $0x148] sm:$0xf]
          %v1229 = vld [vmem:[%s7 + $0x14c] sm:$0xf]
          %v1230 = vld [vmem:[%s7 + $0x150] sm:$0xf]
          %v1231 = vld [vmem:[%s7 + $0x154] sm:$0xf]
          %v1232 = vld [vmem:[%s7 + $0x158] sm:$0xf]
          %v1233 = vld [vmem:[%s7 + $0x15c] sm:$0xf]
          %v1234 = vld [vmem:[%s7 + $0x160] sm:$0xf]
          %v1235 = vld [vmem:[%s7 + $0x164] sm:$0xf]
          %v1236 = vld [vmem:[%s7 + $0x168] sm:$0xf]
          %v1237 = vld [vmem:[%s7 + $0x16c] sm:$0xf]
          %v1238 = vld [vmem:[%s7 + $0x170] sm:$0xf]
          %v1239 = vld [vmem:[%s7 + $0x174] sm:$0xf]
          %v1240 = vld [vmem:[%s7 + $0x178] sm:$0xf]
          %v1241 = vld [vmem:[%s7 + $0x17c] sm:$0xf]
          %v1242 = vld [vmem:[%s7 + $0x180] sm:$0xf]
          %v1243 = vld [vmem:[%s7 + $0x184] sm:$0xf]
          %v1244 = vld [vmem:[%s7 + $0x188] sm:$0xf]
          %v1245 = vld [vmem:[%s7 + $0x18c] sm:$0xf]
          %v1246 = vld [vmem:[%s7 + $0x190] sm:$0xf]
          %v1247 = vld [vmem:[%s7 + $0x194] sm:$0xf]
          %v1248 = vld [vmem:[%s7 + $0x198] sm:$0xf]
          %v1249 = vld [vmem:[%s7 + $0x19c] sm:$0xf]
          %v1250 = vld [vmem:[%s7 + $0x1a0] sm:$0xf]
          %v1251 = vld [vmem:[%s7 + $0x1a4] sm:$0xf]
          %v1252 = vld [vmem:[%s7 + $0x1a8] sm:$0xf]
          %v1253 = vld [vmem:[%s7 + $0x1ac] sm:$0xf]
          %v1254 = vld [vmem:[%s7 + $0x1b0] sm:$0xf]
          %v1255 = vld [vmem:[%s7 + $0x1b4] sm:$0xf]
          %v1256 = vld [vmem:[%s7 + $0x1b8] sm:$0xf]
          %v1257 = vld [vmem:[%s7 + $0x1bc] sm:$0xf]
          %v1258 = vld [vmem:[%s7 + $0x1c0] sm:$0xf]
          %v1259 = vld [vmem:[%s7 + $0x1c4] sm:$0xf]
          %v1260 = vld [vmem:[%s7 + $0x1c8] sm:$0xf]
          %v1261 = vld [vmem:[%s7 + $0x1cc] sm:$0xf]
          %v1262 = vld [vmem:[%s7 + $0x1d0] sm:$0xf]
          %v1263 = vld [vmem:[%s7 + $0x1d4] sm:$0xf]
          %v1264 = vld [vmem:[%s7 + $0x1d8] sm:$0xf]
          %v1265 = vld [vmem:[%s7 + $0x1dc] sm:$0xf]
          %v1266 = vld [vmem:[%s7 + $0x1e0] sm:$0xf]
          %v1267 = vld [vmem:[%s7 + $0x1e4] sm:$0xf]
          %v1268 = vld [vmem:[%s7 + $0x1e8] sm:$0xf]
          %v1269 = vld [vmem:[%s7 + $0x1ec] sm:$0xf]
          %v1270 = vld [vmem:[%s7 + $0x1f0] sm:$0xf]
          %v1271 = vld [vmem:[%s7 + $0x1f4] sm:$0xf]
          %v1272 = vld [vmem:[%s7 + $0x1f8] sm:$0xf]
          %v1273 = vld [vmem:[%s7 + $0x1fc] sm:$0xf]
          %v1274 = vld [vmem:[%s8] sm:$0x1]
          %v1276 = vperm.slane %v1274, 0
          %v1406 = vunpack.c.l.b16 %v1146
          %v1407 = vunpack.c.l.b16 %v1147
          %v1408 = vunpack.c.l.b16 %v1148
          %v1409 = vunpack.c.l.b16 %v1149
          %v1410 = vunpack.c.l.b16 %v1150
          %v1411 = vunpack.c.l.b16 %v1151
          %v1412 = vunpack.c.l.b16 %v1152
          %v1413 = vunpack.c.l.b16 %v1153
          %v1414 = vunpack.c.l.b16 %v1154
          %v1415 = vunpack.c.l.b16 %v1155
          %v1416 = vunpack.c.l.b16 %v1156
          %v1417 = vunpack.c.l.b16 %v1157
          %v1418 = vunpack.c.l.b16 %v1158
          %v1419 = vunpack.c.l.b16 %v1159
          %v1420 = vunpack.c.l.b16 %v1160
          %v1421 = vunpack.c.l.b16 %v1161
          %v1422 = vunpack.c.l.b16 %v1162
          %v1423 = vunpack.c.l.b16 %v1163
          %v1424 = vunpack.c.l.b16 %v1164
          %v1425 = vunpack.c.l.b16 %v1165
          %v1426 = vunpack.c.l.b16 %v1166
          %v1427 = vunpack.c.l.b16 %v1167
          %v1428 = vunpack.c.l.b16 %v1168
          %v1429 = vunpack.c.l.b16 %v1169
          %v1430 = vunpack.c.l.b16 %v1170
          %v1431 = vunpack.c.l.b16 %v1171
          %v1432 = vunpack.c.l.b16 %v1172
          %v1433 = vunpack.c.l.b16 %v1173
          %v1434 = vunpack.c.l.b16 %v1174
          %v1435 = vunpack.c.l.b16 %v1175
          %v1436 = vunpack.c.l.b16 %v1176
          %v1437 = vunpack.c.l.b16 %v1177
          %v1438 = vunpack.c.l.b16 %v1178
          %v1439 = vunpack.c.l.b16 %v1179
          %v1440 = vunpack.c.l.b16 %v1180
          %v1441 = vunpack.c.l.b16 %v1181
          %v1442 = vunpack.c.l.b16 %v1182
          %v1443 = vunpack.c.l.b16 %v1183
          %v1444 = vunpack.c.l.b16 %v1184
          %v1445 = vunpack.c.l.b16 %v1185
          %v1446 = vunpack.c.l.b16 %v1186
          %v1447 = vunpack.c.l.b16 %v1187
          %v1448 = vunpack.c.l.b16 %v1188
          %v1449 = vunpack.c.l.b16 %v1189
          %v1450 = vunpack.c.l.b16 %v1190
          %v1451 = vunpack.c.l.b16 %v1191
          %v1452 = vunpack.c.l.b16 %v1192
          %v1453 = vunpack.c.l.b16 %v1193
          %v1454 = vunpack.c.l.b16 %v1194
          %v1455 = vunpack.c.l.b16 %v1195
          %v1456 = vunpack.c.l.b16 %v1196
          %v1457 = vunpack.c.l.b16 %v1197
          %v1458 = vunpack.c.l.b16 %v1198
          %v1459 = vunpack.c.l.b16 %v1199
          %v1460 = vunpack.c.l.b16 %v1200
          %v1461 = vunpack.c.l.b16 %v1201
          %v1462 = vunpack.c.l.b16 %v1202
          %v1463 = vunpack.c.l.b16 %v1203
          %v1464 = vunpack.c.l.b16 %v1204
          %v1465 = vunpack.c.l.b16 %v1205
          %v1466 = vunpack.c.l.b16 %v1206
          %v1467 = vunpack.c.l.b16 %v1207
          %v1468 = vunpack.c.l.b16 %v1208
          %v1469 = vunpack.c.l.b16 %v1209
          %v1470 = vunpack.c.l.b16 %v1210
          %v1471 = vunpack.c.l.b16 %v1211
          %v1472 = vunpack.c.l.b16 %v1212
          %v1473 = vunpack.c.l.b16 %v1213
          %v1474 = vunpack.c.l.b16 %v1214
          %v1475 = vunpack.c.l.b16 %v1215
          %v1476 = vunpack.c.l.b16 %v1216
          %v1477 = vunpack.c.l.b16 %v1217
          %v1478 = vunpack.c.l.b16 %v1218
          %v1479 = vunpack.c.l.b16 %v1219
          %v1480 = vunpack.c.l.b16 %v1220
          %v1481 = vunpack.c.l.b16 %v1221
          %v1482 = vunpack.c.l.b16 %v1222
          %v1483 = vunpack.c.l.b16 %v1223
          %v1484 = vunpack.c.l.b16 %v1224
          %v1485 = vunpack.c.l.b16 %v1225
          %v1486 = vunpack.c.l.b16 %v1226
          %v1487 = vunpack.c.l.b16 %v1227
          %v1488 = vunpack.c.l.b16 %v1228
          %v1489 = vunpack.c.l.b16 %v1229
          %v1490 = vunpack.c.l.b16 %v1230
          %v1491 = vunpack.c.l.b16 %v1231
          %v1492 = vunpack.c.l.b16 %v1232
          %v1493 = vunpack.c.l.b16 %v1233
          %v1494 = vunpack.c.l.b16 %v1234
          %v1495 = vunpack.c.l.b16 %v1235
          %v1496 = vunpack.c.l.b16 %v1236
          %v1497 = vunpack.c.l.b16 %v1237
          %v1498 = vunpack.c.l.b16 %v1238
          %v1499 = vunpack.c.l.b16 %v1239
          %v1500 = vunpack.c.l.b16 %v1240
          %v1501 = vunpack.c.l.b16 %v1241
          %v1502 = vunpack.c.l.b16 %v1242
          %v1503 = vunpack.c.l.b16 %v1243
          %v1504 = vunpack.c.l.b16 %v1244
          %v1505 = vunpack.c.l.b16 %v1245
          %v1506 = vunpack.c.l.b16 %v1246
          %v1507 = vunpack.c.l.b16 %v1247
          %v1508 = vunpack.c.l.b16 %v1248
          %v1509 = vunpack.c.l.b16 %v1249
          %v1510 = vunpack.c.l.b16 %v1250
          %v1511 = vunpack.c.l.b16 %v1251
          %v1512 = vunpack.c.l.b16 %v1252
          %v1513 = vunpack.c.l.b16 %v1253
          %v1514 = vunpack.c.l.b16 %v1254
          %v1515 = vunpack.c.l.b16 %v1255
          %v1516 = vunpack.c.l.b16 %v1256
          %v1517 = vunpack.c.l.b16 %v1257
          %v1518 = vunpack.c.l.b16 %v1258
          %v1519 = vunpack.c.l.b16 %v1259
          %v1520 = vunpack.c.l.b16 %v1260
          %v1521 = vunpack.c.l.b16 %v1261
          %v1522 = vunpack.c.l.b16 %v1262
          %v1523 = vunpack.c.l.b16 %v1263
          %v1524 = vunpack.c.l.b16 %v1264
          %v1525 = vunpack.c.l.b16 %v1265
          %v1526 = vunpack.c.l.b16 %v1266
          %v1527 = vunpack.c.l.b16 %v1267
          %v1528 = vunpack.c.l.b16 %v1268
          %v1529 = vunpack.c.l.b16 %v1269
          %v1530 = vunpack.c.l.b16 %v1270
          %v1531 = vunpack.c.l.b16 %v1271
          %v1532 = vunpack.c.l.b16 %v1272
          %v1533 = vunpack.c.l.b16 %v1273
          %v1534 = vpack.c.b16 %v1407, %v1406
          %v1535 = vpack.c.b16 %v1409, %v1408
          %v1536 = vpack.c.b16 %v1411, %v1410
          %v1537 = vpack.c.b16 %v1413, %v1412
          %v1538 = vpack.c.b16 %v1415, %v1414
          %v1539 = vpack.c.b16 %v1417, %v1416
          %v1540 = vpack.c.b16 %v1419, %v1418
          %v1541 = vpack.c.b16 %v1421, %v1420
          %v1542 = vpack.c.b16 %v1423, %v1422
          %v1543 = vpack.c.b16 %v1425, %v1424
          %v1544 = vpack.c.b16 %v1427, %v1426
          %v1545 = vpack.c.b16 %v1429, %v1428
          %v1546 = vpack.c.b16 %v1431, %v1430
          %v1547 = vpack.c.b16 %v1433, %v1432
          %v1548 = vpack.c.b16 %v1435, %v1434
          %v1549 = vpack.c.b16 %v1437, %v1436
          %v1550 = vpack.c.b16 %v1439, %v1438
          %v1551 = vpack.c.b16 %v1441, %v1440
          %v1552 = vpack.c.b16 %v1443, %v1442
          %v1553 = vpack.c.b16 %v1445, %v1444
          %v1554 = vpack.c.b16 %v1447, %v1446
          %v1555 = vpack.c.b16 %v1449, %v1448
          %v1556 = vpack.c.b16 %v1451, %v1450
          %v1557 = vpack.c.b16 %v1453, %v1452
          %v1558 = vpack.c.b16 %v1455, %v1454
          %v1559 = vpack.c.b16 %v1457, %v1456
          %v1560 = vpack.c.b16 %v1459, %v1458
          %v1561 = vpack.c.b16 %v1461, %v1460
          %v1562 = vpack.c.b16 %v1463, %v1462
          %v1563 = vpack.c.b16 %v1465, %v1464
          %v1564 = vpack.c.b16 %v1467, %v1466
          %v1565 = vpack.c.b16 %v1469, %v1468
          %v1566 = vpack.c.b16 %v1471, %v1470
          %v1567 = vpack.c.b16 %v1473, %v1472
          %v1568 = vpack.c.b16 %v1475, %v1474
          %v1569 = vpack.c.b16 %v1477, %v1476
          %v1570 = vpack.c.b16 %v1479, %v1478
          %v1571 = vpack.c.b16 %v1481, %v1480
          %v1572 = vpack.c.b16 %v1483, %v1482
          %v1573 = vpack.c.b16 %v1485, %v1484
          %v1574 = vpack.c.b16 %v1487, %v1486
          %v1575 = vpack.c.b16 %v1489, %v1488
          %v1576 = vpack.c.b16 %v1491, %v1490
          %v1577 = vpack.c.b16 %v1493, %v1492
          %v1578 = vpack.c.b16 %v1495, %v1494
          %v1579 = vpack.c.b16 %v1497, %v1496
          %v1580 = vpack.c.b16 %v1499, %v1498
          %v1581 = vpack.c.b16 %v1501, %v1500
          %v1582 = vpack.c.b16 %v1503, %v1502
          %v1583 = vpack.c.b16 %v1505, %v1504
          %v1584 = vpack.c.b16 %v1507, %v1506
          %v1585 = vpack.c.b16 %v1509, %v1508
          %v1586 = vpack.c.b16 %v1511, %v1510
          %v1587 = vpack.c.b16 %v1513, %v1512
          %v1588 = vpack.c.b16 %v1515, %v1514
          %v1589 = vpack.c.b16 %v1517, %v1516
          %v1590 = vpack.c.b16 %v1519, %v1518
          %v1591 = vpack.c.b16 %v1521, %v1520
          %v1592 = vpack.c.b16 %v1523, %v1522
          %v1593 = vpack.c.b16 %v1525, %v1524
          %v1594 = vpack.c.b16 %v1527, %v1526
          %v1595 = vpack.c.b16 %v1529, %v1528
          %v1596 = vpack.c.b16 %v1531, %v1530
          %v1597 = vpack.c.b16 %v1533, %v1532
          %1662 = vmatpush.bf16.msra.mxu0 %v1541
          %1663 = vmatpush.bf16.msra.mxu0 %v1540
          %1664 = vmatpush.bf16.msra.mxu0 %v1539
          %1665 = vmatpush.bf16.msra.mxu0 %v1538
          %1666 = vmatpush.bf16.msra.mxu0 %v1537
          %1667 = vmatpush.bf16.msra.mxu0 %v1536
          %1668 = vmatpush.bf16.msra.mxu0 %v1535
          %1669 = vmatpush.bf16.msra.mxu0 %v1534
          %1670 = vmatmul.bf16.gmra.mxu0 %v516
          %v1671 = vpop.f32.mrf.mxu0
          %v1672 = vadd.f32 %v1276, %v1671
          %v1673 = vpop.f32.mrf.mxu0
          %1674 = vdwg.mxu0
          %1675 = vmatpush.bf16.msra.mxu0 %v1549
          %1676 = vmatpush.bf16.msra.mxu0 %v1548
          %1677 = vmatpush.bf16.msra.mxu0 %v1547
          %1678 = vmatpush.bf16.msra.mxu0 %v1546
          %1679 = vmatpush.bf16.msra.mxu0 %v1545
          %1680 = vmatpush.bf16.msra.mxu0 %v1544
          %1681 = vmatpush.bf16.msra.mxu0 %v1543
          %1682 = vmatpush.bf16.msra.mxu0 %v1542
          %1683 = vmatmul.bf16.gmra.mxu0 %v517
          %v1684 = vpop.f32.mrf.mxu0
          %v1685 = vadd.f32 %v1672, %v1684
          %v1686 = vpop.f32.mrf.mxu0
          %1687 = vdwg.mxu0
          %1688 = vmatpush.bf16.msra.mxu0 %v1557
          %1689 = vmatpush.bf16.msra.mxu0 %v1556
          %1690 = vmatpush.bf16.msra.mxu0 %v1555
          %1691 = vmatpush.bf16.msra.mxu0 %v1554
          %1692 = vmatpush.bf16.msra.mxu0 %v1553
          %1693 = vmatpush.bf16.msra.mxu0 %v1552
          %1694 = vmatpush.bf16.msra.mxu0 %v1551
          %1695 = vmatpush.bf16.msra.mxu0 %v1550
          %1696 = vmatmul.bf16.gmra.mxu0 %v518
          %v1697 = vpop.f32.mrf.mxu0
          %v1698 = vadd.f32 %v1685, %v1697
          %v1699 = vpop.f32.mrf.mxu0
          %1700 = vdwg.mxu0
          %1701 = vmatpush.bf16.msra.mxu0 %v1565
          %1702 = vmatpush.bf16.msra.mxu0 %v1564
          %1703 = vmatpush.bf16.msra.mxu0 %v1563
          %1704 = vmatpush.bf16.msra.mxu0 %v1562
          %1705 = vmatpush.bf16.msra.mxu0 %v1561
          %1706 = vmatpush.bf16.msra.mxu0 %v1560
          %1707 = vmatpush.bf16.msra.mxu0 %v1559
          %1708 = vmatpush.bf16.msra.mxu0 %v1558
          %1709 = vmatmul.bf16.gmra.mxu0 %v519
          %v1710 = vpop.f32.mrf.mxu0
          %v1711 = vadd.f32 %v1698, %v1710
          %v1712 = vpop.f32.mrf.mxu0
          %1713 = vdwg.mxu0
          %1714 = vmatpush.bf16.msra.mxu0 %v1573
          %1715 = vmatpush.bf16.msra.mxu0 %v1572
          %1716 = vmatpush.bf16.msra.mxu0 %v1571
          %1717 = vmatpush.bf16.msra.mxu0 %v1570
          %1718 = vmatpush.bf16.msra.mxu0 %v1569
          %1719 = vmatpush.bf16.msra.mxu0 %v1568
          %1720 = vmatpush.bf16.msra.mxu0 %v1567
          %1721 = vmatpush.bf16.msra.mxu0 %v1566
          %1722 = vmatmul.bf16.gmra.mxu0 %v520
          %v1723 = vpop.f32.mrf.mxu0
          %v1724 = vadd.f32 %v1711, %v1723
          %v1725 = vpop.f32.mrf.mxu0
          %1726 = vdwg.mxu0
          %1727 = vmatpush.bf16.msra.mxu0 %v1581
          %1728 = vmatpush.bf16.msra.mxu0 %v1580
          %1729 = vmatpush.bf16.msra.mxu0 %v1579
          %1730 = vmatpush.bf16.msra.mxu0 %v1578
          %1731 = vmatpush.bf16.msra.mxu0 %v1577
          %1732 = vmatpush.bf16.msra.mxu0 %v1576
          %1733 = vmatpush.bf16.msra.mxu0 %v1575
          %1734 = vmatpush.bf16.msra.mxu0 %v1574
          %1735 = vmatmul.bf16.gmra.mxu0 %v521
          %v1736 = vpop.f32.mrf.mxu0
          %v1737 = vadd.f32 %v1724, %v1736
          %v1738 = vpop.f32.mrf.mxu0
          %1739 = vdwg.mxu0
          %1740 = vmatpush.bf16.msra.mxu0 %v1589
          %1741 = vmatpush.bf16.msra.mxu0 %v1588
          %1742 = vmatpush.bf16.msra.mxu0 %v1587
          %1743 = vmatpush.bf16.msra.mxu0 %v1586
          %1744 = vmatpush.bf16.msra.mxu0 %v1585
          %1745 = vmatpush.bf16.msra.mxu0 %v1584
          %1746 = vmatpush.bf16.msra.mxu0 %v1583
          %1747 = vmatpush.bf16.msra.mxu0 %v1582
          %1748 = vmatmul.bf16.gmra.mxu0 %v522
          %v1749 = vpop.f32.mrf.mxu0
          %v1750 = vadd.f32 %v1737, %v1749
          %v1751 = vpop.f32.mrf.mxu0
          %1752 = vdwg.mxu0
          %1753 = vmatpush.bf16.msra.mxu0 %v1597
          %1754 = vmatpush.bf16.msra.mxu0 %v1596
          %1755 = vmatpush.bf16.msra.mxu0 %v1595
          %1756 = vmatpush.bf16.msra.mxu0 %v1594
          %1757 = vmatpush.bf16.msra.mxu0 %v1593
          %1758 = vmatpush.bf16.msra.mxu0 %v1592
          %1759 = vmatpush.bf16.msra.mxu0 %v1591
          %1760 = vmatpush.bf16.msra.mxu0 %v1590
          %1761 = vmatmul.bf16.gmra.mxu0 %v523
          %v1762 = vpop.f32.mrf.mxu0
          %v1763 = vadd.f32 %v1750, %v1762
          %v1764 = vpop.f32.mrf.mxu0
          %1765 = vdwg.mxu0
          %1766 = vst.msk [vmem:[#allocation3] sm:$0xff] %vm1144, %v1763
        $region68: #{tpu_custom_call.1} parent=63 // pred_fallthru
          _
        %v1767 = vld [vmem:[%s476] sm:$0xff]
        %v1768 = vpack.c.bf16 %v1767, %v1767
        %v1769 = vld [vmem:[%s3] sm:$0xf]
        %v1770 = vld [vmem:[%s4] sm:$0x1]
        %v1772 = vperm.slane %v1770, 0
        %vm1774 = vcmask 64512
        %v1776 = vsel %vm1774, %v1768, 0
        %vm1778 = vcmask 1043456
        %v1780 = vsel %vm1778, %v1769, 0
        %1782 = vmatpush.bf16.msra.mxu0 0
        %1783 = vmatpush.bf16.msra.mxu0 0
        %1784 = vmatpush.bf16.msra.mxu0 0
        %1785 = vmatpush.bf16.msra.mxu0 0
        %1786 = vmatpush.bf16.msra.mxu0 0
        %1787 = vmatpush.bf16.msra.mxu0 0
        %1788 = vmatpush.bf16.msra.mxu0 0
        %1789 = vmatpush.bf16.msra.mxu0 %v1780
        %1790 = vmatmul.bf16.gmra.mxu0 %v1776
        %v1791 = vpop.f32.mrf.mxu0
        %v1792 = vadd.f32 %v1772, %v1791
        %v1793 = vpop.f32.mrf.mxu0
        %1794 = vdwg.mxu0
        %v1795 = vmul.f32 %v1792, 0.25
        %vm1796 = vcmask 261120
        %1797 = vst.msk [vmem:[#allocation4] sm:$0xff] %vm1796, %v1795
        %v1798 = vld [vmem:[#allocation4] sm:$0xff]
        %v1799 = vpack.c.bf16 %v1798, %v1798
        %v1800 = vld [vmem:[#allocation2] sm:$0xff]
        %v1801 = vpack.c.bf16 %v1800, %v1800
        %v1802 = vld [vmem:[#allocation3] sm:$0xff]
        %v1803 = vpack.c.bf16 %v1802, %v1802
        %vm1804 = vcmask 130048
        %v1806 = vsel %vm1804, %v1799, 0
        %v1809 = vsel %vm1804, %v1801, 0
        %1811 = vmatpush.bf16.xpose.msra.mxu0 0
        %1812 = vmatpush.bf16.xpose.msra.mxu0 0
        %1813 = vmatpush.bf16.xpose.msra.mxu0 0
        %1814 = vmatpush.bf16.xpose.msra.mxu0 0
        %1815 = vmatpush.bf16.xpose.msra.mxu0 0
        %1816 = vmatpush.bf16.xpose.msra.mxu0 0
        %1817 = vmatpush.bf16.xpose.msra.mxu0 0
        %1818 = vmatpush.bf16.xpose.msra.mxu0 %v1809
        %1819 = vmatmul.bf16.gmra.mxu0 %v1806
        %v1820 = vpop.f32.mrf.mxu0
        %v1821 = vadd.f32 0.0, %v1820
        %v1822 = vpop.f32.mrf.mxu0
        %1823 = vdwg.mxu0
        %v1824 = vsel %vm1774, %v1821, -inf
        %1825 = vmax.xlane.f32.xlu0 %v1824
        %v1826 = vpop.xlane.xlu0 %1825
        %v1827 = vsub.f32 %v1821, %v1826
        %v1828 = vmul.f32 %v1827, 1.442695
        %v1829 = vpow.pop %v1828
        %v1830 = vsel %vm1774, %v1829, 0.0
        %1831 = vadd.xlane.f32.xlu0 %v1830
        %v1832 = vpop.xlane.xlu0 %1831
        %v1833 = vrcp.pop %v1832
        %v1834 = vmul.f32 %v1832, %v1833
        %v1835 = vsub.f32 1.0, %v1834
        %v1836 = vmul.f32 %v1833, %v1835
        %v1837 = vadd.f32 %v1833, %v1836
        %vm1838 = vweird.f32 %v1832
        %vm1839 = vweird.f32 %v1833
        %vm1840 = vmor %vm1838, %vm1839
        %v1841 = vsel %vm1840, %v1833, %v1837
        %v1842 = vand.u32 2147483647, %v1832
        %vm1843 = vcmp.eq.f32.partialorder %v1842, 8.507059e+37
        %v1844 = vand.u32 %v1832, 2147483648
        %v1845 = vor.u32 1.1754944e-38, %v1844
        %v1846 = vsel %vm1843, %v1845, %v1841
        %v1847 = vmul.f32 %v1829, %v1846
        %1848 = vst.msk [vmem:[%s469] sm:$0xff] %vm1774, %v1847
        %v1849 = vpack.c.bf16 %v1847, %v1847
        %v1851 = vsel %vm1774, %v1849, 0
        %v1854 = vsel %vm1778, %v1803, 0
        %1856 = vmatpush.bf16.msra.mxu0 0
        %1857 = vmatpush.bf16.msra.mxu0 0
        %1858 = vmatpush.bf16.msra.mxu0 0
        %1859 = vmatpush.bf16.msra.mxu0 0
        %1860 = vmatpush.bf16.msra.mxu0 0
        %1861 = vmatpush.bf16.msra.mxu0 0
        %1862 = vmatpush.bf16.msra.mxu0 0
        %1863 = vmatpush.bf16.msra.mxu0 %v1854
        %1864 = vmatmul.bf16.gmra.mxu0 %v1851
        %v1865 = vpop.f32.mrf.mxu0
        %v1866 = vadd.f32 0.0, %v1865
        %v1867 = vpop.f32.mrf.mxu0
        %1868 = vdwg.mxu0
        %1869 = vst.msk [vmem:[#allocation5] sm:$0xff] %vm1804, %v1866
        %v1870 = vld [vmem:[#allocation4] sm:$0xff]
        %v1871 = vpack.c.bf16 %v1870, %v1870
        %v1872 = vld [vmem:[#allocation2] sm:$0xff]
        %v1873 = vpack.c.bf16 %v1872, %v1872
        %v1874 = vld [vmem:[#allocation3] sm:$0xff]
        %v1875 = vpack.c.bf16 %v1874, %v1874
        %1877 = vrot.lane.b32.xlu0 %v1871, 112
        %v1878 = vpop.permute.xlu0 %1877
        %1880 = vrot.lane.b32.xlu0 %v1873, 112
        %v1881 = vpop.permute.xlu0 %1880
        %v1883 = vsel %vm1804, %v1878, 0
        %v1886 = vsel %vm1804, %v1881, 0
        %1888 = vmatpush.bf16.xpose.msra.mxu0 0
        %1889 = vmatpush.bf16.xpose.msra.mxu0 0
        %1890 = vmatpush.bf16.xpose.msra.mxu0 0
        %1891 = vmatpush.bf16.xpose.msra.mxu0 0
        %1892 = vmatpush.bf16.xpose.msra.mxu0 0
        %1893 = vmatpush.bf16.xpose.msra.mxu0 0
        %1894 = vmatpush.bf16.xpose.msra.mxu0 0
        %1895 = vmatpush.bf16.xpose.msra.mxu0 %v1886
        %1896 = vmatmul.bf16.gmra.mxu0 %v1883
        %v1897 = vpop.f32.mrf.mxu0
        %v1898 = vadd.f32 0.0, %v1897
        %v1899 = vpop.f32.mrf.mxu0
        %1900 = vdwg.mxu0
        %v1901 = vsel %vm1774, %v1898, -inf
        %1902 = vmax.xlane.f32.xlu0 %v1901
        %v1903 = vpop.xlane.xlu0 %1902
        %v1904 = vsub.f32 %v1898, %v1903
        %v1905 = vmul.f32 %v1904, 1.442695
        %v1906 = vpow.pop %v1905
        %v1907 = vsel %vm1774, %v1906, 0.0
        %1908 = vadd.xlane.f32.xlu0 %v1907
        %v1909 = vpop.xlane.xlu0 %1908
        %v1910 = vrcp.pop %v1909
        %v1911 = vmul.f32 %v1909, %v1910
        %v1912 = vsub.f32 1.0, %v1911
        %v1913 = vmul.f32 %v1910, %v1912
        %v1914 = vadd.f32 %v1910, %v1913
        %vm1915 = vweird.f32 %v1909
        %vm1916 = vweird.f32 %v1910
        %vm1917 = vmor %vm1915, %vm1916
        %v1918 = vsel %vm1917, %v1910, %v1914
        %v1919 = vand.u32 2147483647, %v1909
        %vm1920 = vcmp.eq.f32.partialorder %v1919, 8.507059e+37
        %v1921 = vand.u32 %v1909, 2147483648
        %v1922 = vor.u32 1.1754944e-38, %v1921
        %v1923 = vsel %vm1920, %v1922, %v1918
        %v1924 = vmul.f32 %v1906, %v1923
        %s1925 = scalar_lea.vmem %s469, 8 [#allocation8]
        %1926 = vst.msk [vmem:[%s1925] sm:$0xff] %vm1774, %v1924
        %v1927 = vpack.c.bf16 %v1924, %v1924
        %1929 = vrot.lane.b32.xlu0 %v1875, 112
        %v1930 = vpop.permute.xlu0 %1929
        %v1932 = vsel %vm1774, %v1927, 0
        %v1935 = vsel %vm1778, %v1930, 0
        %1937 = vmatpush.bf16.msra.mxu0 0
        %1938 = vmatpush.bf16.msra.mxu0 0
        %1939 = vmatpush.bf16.msra.mxu0 0
        %1940 = vmatpush.bf16.msra.mxu0 0
        %1941 = vmatpush.bf16.msra.mxu0 0
        %1942 = vmatpush.bf16.msra.mxu0 0
        %1943 = vmatpush.bf16.msra.mxu0 0
        %1944 = vmatpush.bf16.msra.mxu0 %v1935
        %1945 = vmatmul.bf16.gmra.mxu0 %v1932
        %v1946 = vpop.f32.mrf.mxu0
        %v1947 = vadd.f32 0.0, %v1946
        %v1948 = vpop.f32.mrf.mxu0
        %1949 = vdwg.mxu0
        %1951 = vrot.lane.b32.xlu0 %v1947, 16
        %v1952 = vpop.permute.xlu0 %1951
        %vm1954 = vcmask 261248
        %1955 = vst.msk [vmem:[#allocation5] sm:$0xff] %vm1954, %v1952
        %v1956 = vld [vmem:[#allocation5] sm:$0xff]
        %v1957 = vpack.c.bf16 %v1956, %v1956
        %v1958 = vld [vmem:[%s9] sm:$0xf]
        %v1959 = vld [vmem:[%s9 + $0x4] sm:$0xf]
        %v1960 = vld [vmem:[%s9 + $0x8] sm:$0xf]
        %v1961 = vld [vmem:[%s9 + $0xc] sm:$0xf]
        %v1962 = vld [vmem:[%s10] sm:$0x1]
        %v1964 = vperm.slane %v1962, 0
        %v1970 = vunpack.c.l.b16 %v1958
        %v1971 = vunpack.c.l.b16 %v1959
        %v1972 = vunpack.c.l.b16 %v1960
        %v1973 = vunpack.c.l.b16 %v1961
        %v1974 = vpack.c.b16 %v1971, %v1970
        %v1975 = vpack.c.b16 %v1973, %v1972
        %v1979 = vsel %vm1796, %v1957, 0
        %1981 = vmatpush.bf16.msra.mxu0 0
        %1982 = vmatpush.bf16.msra.mxu0 0
        %1983 = vmatpush.bf16.msra.mxu0 0
        %1984 = vmatpush.bf16.msra.mxu0 0
        %1985 = vmatpush.bf16.msra.mxu0 0
        %1986 = vmatpush.bf16.msra.mxu0 0
        %1987 = vmatpush.bf16.msra.mxu0 %v1975
        %1988 = vmatpush.bf16.msra.mxu0 %v1974
        %1989 = vmatmul.bf16.gmra.mxu0 %v1979
        %v1990 = vpop.f32.mrf.mxu0
        %v1991 = vadd.f32 %v1964, %v1990
        %v1992 = vpop.f32.mrf.mxu0
        %1993 = vdwg.mxu0
        %1994 = vst.msk [vmem:[%s462] sm:$0xff] %vm1796, %v1991
        %s1995 = sand.u32 %s300, 1
        %s1996 = scalar_lea.sflag [#allocation7], %s1995
        %s1997 = sand.u32 %s300, 1
        %s1998 = smul.addr %s1997, 8
        %s1999 = scalar_lea.vmem [#allocation6], %s1998
        %s2000 = sand.u32 %s328, 1
        %s2001 = scalar_lea.sflag [#allocation9], %s2000
        %s2002 = sand.u32 %s328, 1
        %s2003 = smul.addr %s2002, 16
        %s2004 = scalar_lea.vmem [#allocation8], %s2003
        // Predicated region
        $region69: #{tpu_custom_call.1} parent=63 // pred_check
          %p2005 = pneg %p310
        $region70: #{tpu_custom_call.1} parent=63 // pred_check_branch
          %2007 = sbr.rel (%p2005) target = $region72
        $region71: #{tpu_custom_call.1} parent=63 // pred_region
          %2009 = vsyncadd %s1996, 0
          %s2010 = sadd.s32 %s35, %s34
          %s2011 = smul.addr %s2010, 8
          %s2012 = scalar_lea.hbm %s11, %s2011
          %s2014 = sshll.u32 %s1999, 4
          %s2015 = int_to_ptr.vmem [resolvable:$true] %s2014
          %s2016 = sshll.u32 %s2012, 4
          %s2017 = int_to_ptr.hbm [resolvable:$true] %s2016
          %2019 = dma.vmem_to_hbm [thread:$0]  %s2015, 128, %s2017, %s1996
        $region72: #{tpu_custom_call.1} parent=63 // pred_fallthru
          _
        // Predicated region
        $region73: #{tpu_custom_call.1} parent=63 // pred_check
          %p2020 = pneg %p338
        $region74: #{tpu_custom_call.1} parent=63 // pred_check_branch
          %2022 = sbr.rel (%p2020) target = $region76
        $region75: #{tpu_custom_call.1} parent=63 // pred_region
          %2024 = vsyncadd %s2001, 0
          %s2025 = smul.addr %s34, 2
          %s2026 = sadd.s32 %s35, %s2025
          %s2027 = smul.addr %s2026, 8
          %s2028 = scalar_lea.hbm %s12, %s2027
          %s2029 = sshll.u32 %s2004, 4
          %s2030 = int_to_ptr.vmem [resolvable:$true] %s2029
          %s2031 = sshll.u32 %s2028, 4
          %s2032 = int_to_ptr.hbm [resolvable:$true] %s2031
          %2037 = dma.vmem_to_hbm [thread:$0]  %s2030, 256, %s2032, %s2001, 128, 128, 8
        $region76: #{tpu_custom_call.1} parent=63 // pred_fallthru
          _
      $region64: #{tpu_custom_call.1} parent=5 // pred_fallthru
        _
      %p2038 = scmp.le.s32.totalorder 2, %s25
      // Predicated region
      $region77: #{tpu_custom_call.1} parent=5 // pred_check
        %p2039 = pneg %p2038
      $region78: #{tpu_custom_call.1} parent=5 // pred_check_branch
        %2041 = sbr.rel (%p2039) target = $region80
      $region79: #{tpu_custom_call.1} parent=5 // pred_region
        %s2042 = ssub.s32 %s25, 2
        // Predicated region
        $region81: #{tpu_custom_call.1} parent=79 // pred_check
          %p2043 = pneg %p316
        $region82: #{tpu_custom_call.1} parent=79 // pred_check_branch
          %2045 = sbr.rel (%p2043) target = $region84
        $region83: #{tpu_custom_call.1} parent=79 // pred_region
          %s2046 = sand.u32 %s301, 1
          %s2047 = scalar_lea.sflag [#allocation7], %s2046
          %s2048 = sand.u32 %s301, 1
          %s2049 = smul.addr %s2048, 8
          %s2050 = scalar_lea.vmem [#allocation6], %s2049
          %2052 = dma.done %s2047, 128
        $region84: #{tpu_custom_call.1} parent=79 // pred_fallthru
          _
        // Predicated region
        $region85: #{tpu_custom_call.1} parent=79 // pred_check
          %p2053 = pneg %p344
        $region86: #{tpu_custom_call.1} parent=79 // pred_check_branch
          %2055 = sbr.rel (%p2053) target = $region88
        $region87: #{tpu_custom_call.1} parent=79 // pred_region
          %s2056 = sand.u32 %s329, 1
          %s2057 = scalar_lea.sflag [#allocation9], %s2056
          %s2058 = sand.u32 %s329, 1
          %s2059 = smul.addr %s2058, 16
          %s2060 = scalar_lea.vmem [#allocation8], %s2059
          %2062 = dma.done %s2057, 256
        $region88: #{tpu_custom_call.1} parent=79 // pred_fallthru
          _
      $region80: #{tpu_custom_call.1} parent=5 // pred_fallthru
        _
    $region6: #{tpu_custom_call.1} parent=1 // loop_footer
      %s29 = sadd.s32 1, %s25
    $region7: #{tpu_custom_call.1} parent=1 // loop_footer_branch
      %24 = sbr.rel target = $region3
    $region8: #{tpu_custom_call.1} parent=1 // loop_exit
      _
    %2063 = vsyncpa [#allocation7], 1
    %s2064 = scalar_lea.sflag [#allocation7], 1
    %2065 = vsyncpa %s2064, 1
    %2066 = vsyncpa [#allocation9], 1
    %s2067 = scalar_lea.sflag [#allocation9], 1
    %2068 = vsyncpa %s2067, 1

</llo_original>
